<compile_context>
chip_gen: v6e
topology: v6e:2x2x1
jax: 0.10.0
libtpu: 0.0.40
codegen_flags: <defaults>
</compile_context>

<pallas_src>
import jax
import jax.numpy as jnp
from jax import lax
from jax.experimental import pallas as pl
from jax.experimental.pallas import tpu as pltpu


def _lstm_classifier_kernel(toks_ref, lens_ref, w_big_ref, b_ref,
                            w_head_ref, b_head_ref, out_ref):
    """Single invocation: full LSTM recurrence + folded linear head.

    toks_ref:   (T, B, 1) int32  time-major token ids (batch padded to 8)
    lens_ref:   (B, 1)    int32  valid lengths
    w_big_ref:  (V+H, 4H) f32    [[emb @ W_ih]; [W_hh]]  (fused gate weight)
    b_ref:      (1, 4H)   f32    b_ih + b_hh
    w_head_ref: (H, Cpad) f32    W1 @ W2, lane-padded
    b_head_ref: (1, Cpad) f32    b1 @ W2 + b2, lane-padded
    out_ref:    (B, Cpad) f32
    """
    T, B, _ = toks_ref.shape
    H = w_head_ref.shape[0]
    V = w_big_ref.shape[0] - H

    # Hoist all weight/state loads and the vocab iota out of the time loop.
    w_big = w_big_ref[...]                                     # (V+H, 4H)
    b_g = b_ref[...]                                           # (1, 4H)
    w_head = w_head_ref[...]                                   # (H, Cpad)
    b_head = b_head_ref[...]                                   # (1, Cpad)
    lens_v = lens_ref[...]                                     # (B, 1) int32
    vocab_iota = lax.broadcasted_iota(jnp.int32, (B, V), 1)

    def step(t, carry):
        h, c = carry                                           # (B, H) each
        tok_t = toks_ref[t]                                    # (B, 1) int32
        onehot = (tok_t == vocab_iota).astype(jnp.float32)     # (B, V)
        # one fused MXU op: embedding row select + x@W_ih + h@W_hh
        xh = jnp.concatenate([onehot, h], axis=1)              # (B, V+H)
        gates = jnp.dot(xh, w_big,
                        preferred_element_type=jnp.float32) + b_g   # (B, 4H)

        sig = jax.nn.sigmoid(gates)                            # 1 EUP pass, full vreg
        th = jnp.tanh(gates)                                   # 1 EUP pass, full vreg
        i_g = sig[:, 0 * H:1 * H]
        f_g = sig[:, 1 * H:2 * H]
        g_g = th[:, 2 * H:3 * H]
        o_g = sig[:, 3 * H:4 * H]

        c_new = f_g * c + i_g * g_g
        h_new = o_g * jnp.tanh(c_new)

        valid = lens_v > t                                     # (B,1) -> broadcast H
        h = jnp.where(valid, h_new, h)
        c = jnp.where(valid, c_new, c)
        return h, c

    h0 = jnp.zeros((B, H), jnp.float32)
    c0 = jnp.zeros((B, H), jnp.float32)
    h_last, _ = lax.fori_loop(0, T, step, (h0, c0), unroll=True)

    # folded linear head, lane-dense output store
    out_ref[...] = (jnp.dot(h_last, w_head,
                            preferred_element_type=jnp.float32)
                    + b_head).astype(out_ref.dtype)


def moral_classifier_forward(tokens, lens, params):
    """tokens: (B, T) int, lens: (B,) int. Returns logits (B, C) float32."""
    emb = params["embedding"]                                  # (V, E)
    wih, whh, b = params["w_ih"], params["w_hh"], params["b_lstm"]
    w1, b1, w2, b2 = params["w1"], params["b1"], params["w2"], params["b2"]

    B, T = tokens.shape
    V, E = emb.shape
    H = whh.shape[0]
    C = w2.shape[1]

    B_pad = max(8, ((B + 7) // 8) * 8)                         # f32 sublane count
    C_pad = 128                                                # lane-dense output

    # batch padding (padded rows get lens=0 -> stay at zero state; sliced off below)
    tokens_p = jnp.zeros((B_pad, T), jnp.int32).at[:B, :].set(tokens.astype(jnp.int32))
    lens_p = jnp.zeros((B_pad, 1), jnp.int32).at[:B, 0].set(lens.astype(jnp.int32))
    toks_tm = jnp.transpose(tokens_p, (1, 0))[:, :, None]      # (T, B_pad, 1)

    # fused gate weight: [one_hot(tok) ; h] @ [[emb @ W_ih]; [W_hh]]
    w_big = jnp.concatenate(
        [jnp.dot(emb.astype(jnp.float32), wih), whh], axis=0)  # (V+H, 4H)

    # folded head (pure affine chain; inter-layer dropout is identity in eval)
    w_head = jnp.zeros((H, C_pad), jnp.float32).at[:, :C].set(jnp.dot(w1, w2))
    b_head = jnp.zeros((1, C_pad), jnp.float32).at[:, :C].set(jnp.dot(b1, w2) + b2)

    out = pl.pallas_call(
        _lstm_classifier_kernel,
        out_shape=jax.ShapeDtypeStruct((B_pad, C_pad), jnp.float32),
        grid_spec=pltpu.PrefetchScalarGridSpec(
            num_scalar_prefetch=0,
            grid=(1,),                        # whole recurrence in one invocation
            in_specs=[
                pl.BlockSpec((T, B_pad, 1), lambda i: (0, 0, 0)),   # tokens (time-major)
                pl.BlockSpec((B_pad, 1), lambda i: (0, 0)),         # lens
                pl.BlockSpec((V + H, 4 * H), lambda i: (0, 0)),     # fused gate weight
                pl.BlockSpec((1, 4 * H), lambda i: (0, 0)),         # gate bias
                pl.BlockSpec((H, C_pad), lambda i: (0, 0)),         # folded head W
                pl.BlockSpec((1, C_pad), lambda i: (0, 0)),         # folded head b
            ],
            out_specs=pl.BlockSpec((B_pad, C_pad), lambda i: (0, 0)),
        ),
        compiler_params=pltpu.CompilerParams(
            dimension_semantics=("arbitrary",)),
    )(toks_tm, lens_p, w_big, b, w_head, b_head)

    return out[:B, :C]


def _reference_forward(tokens, lens, params):
    """Pure-JAX reference mirroring the PyTorch module in eval mode."""
    emb = params["embedding"]
    wih, whh, b = params["w_ih"], params["w_hh"], params["b_lstm"]
    w1, b1, w2, b2 = params["w1"], params["b1"], params["w2"], params["b2"]
    B, T = tokens.shape
    H = whh.shape[0]
    x = emb[tokens].astype(jnp.float32)                        # (B, T, E)
    h = jnp.zeros((B, H), jnp.float32)
    c = jnp.zeros((B, H), jnp.float32)
    for t in range(T):
        gates = x[:, t] @ wih + h @ whh + b
        i_g = jax.nn.sigmoid(gates[:, 0 * H:1 * H])
        f_g = jax.nn.sigmoid(gates[:, 1 * H:2 * H])
        g_g = jnp.tanh(gates[:, 2 * H:3 * H])
        o_g = jax.nn.sigmoid(gates[:, 3 * H:4 * H])
        c_new = f_g * c + i_g * g_g
        h_new = o_g * jnp.tanh(c_new)
        valid = (lens > t)[:, None]
        h = jnp.where(valid, h_new, h)
        c = jnp.where(valid, c_new, c)
    return (h @ w1 + b1) @ w2 + b2


def make_params(key, vocab=64, embed=32, hidden=32, lin1=16, n_classes=4):
    ks = jax.random.split(key, 8)
    s = 0.1
    return {
        "embedding": s * jax.random.normal(ks[0], (vocab, embed), jnp.float32),
        "w_ih":      s * jax.random.normal(ks[1], (embed, 4 * hidden), jnp.float32),
        "w_hh":      s * jax.random.normal(ks[2], (hidden, 4 * hidden), jnp.float32),
        "b_lstm":    s * jax.random.normal(ks[3], (1, 4 * hidden), jnp.float32),
        "w1":        s * jax.random.normal(ks[4], (hidden, lin1), jnp.float32),
        "b1":        s * jax.random.normal(ks[5], (1, lin1), jnp.float32),
        "w2":        s * jax.random.normal(ks[6], (lin1, n_classes), jnp.float32),
        "b2":        s * jax.random.normal(ks[7], (1, n_classes), jnp.float32),
    }


if __name__ == "__main__":
    key = jax.random.PRNGKey(0)
    kp, kt = jax.random.split(key)

    B, T, V = 2, 8, 64
    params = make_params(kp, vocab=V, embed=32, hidden=32, lin1=16, n_classes=4)

    tokens = jax.random.randint(kt, (B, T), 0, V, dtype=jnp.int32)
    lens = jnp.array([8, 5], dtype=jnp.int32)          # variable-length sequences

    logits = moral_classifier_forward(tokens, lens, params)
    jax.block_until_ready(logits)
    assert logits.shape == (B, 4)

    ref = _reference_forward(tokens, lens, params)
    assert jnp.allclose(logits, ref, atol=1e-4, rtol=1e-4), (
        "max abs err %e" % float(jnp.max(jnp.abs(logits - ref))))
    print("KERNEL_OK")
</pallas_src>

<mosaic_0001>
module attributes {stable_mosaic.version = 11 : i64} {
  func.func @_lstm_classifier_kernel(%arg0: i32, %arg1: memref<8x8x1xi32, #tpu.memory_space<vmem>>, %arg2: memref<8x1xi32, #tpu.memory_space<vmem>>, %arg3: memref<96x128xf32, #tpu.memory_space<vmem>>, %arg4: memref<1x128xf32, #tpu.memory_space<vmem>>, %arg5: memref<32x128xf32, #tpu.memory_space<vmem>>, %arg6: memref<1x128xf32, #tpu.memory_space<vmem>>, %arg7: memref<8x128xf32, #tpu.memory_space<vmem>>) attributes {dimension_semantics = [#tpu.dimension_semantics<arbitrary>], iteration_bounds = array<i64: 1>, scalar_prefetch = 0 : i64, scratch_operands = 0 : i64, tpu.core_type = #tpu.core_type<tc>, window_params = [{pipeline_mode = #tpu.pipeline_mode<synchronous>, transform_indices = @transform_0, window_bounds = array<i64: 8, 8, 1>}, {pipeline_mode = #tpu.pipeline_mode<synchronous>, transform_indices = @transform_1, window_bounds = array<i64: 8, 1>}, {pipeline_mode = #tpu.pipeline_mode<synchronous>, transform_indices = @transform_2, window_bounds = array<i64: 96, 128>}, {pipeline_mode = #tpu.pipeline_mode<synchronous>, transform_indices = @transform_3, window_bounds = array<i64: 1, 128>}, {pipeline_mode = #tpu.pipeline_mode<synchronous>, transform_indices = @transform_4, window_bounds = array<i64: 32, 128>}, {pipeline_mode = #tpu.pipeline_mode<synchronous>, transform_indices = @transform_5, window_bounds = array<i64: 1, 128>}, {pipeline_mode = #tpu.pipeline_mode<synchronous>, transform_indices = @transform_6, window_bounds = array<i64: 8, 128>}]} {
    %c0 = arith.constant 0 : index
    %c0_0 = arith.constant 0 : index
    %0 = vector.load %arg3[%c0, %c0_0] : memref<96x128xf32, #tpu.memory_space<vmem>>, vector<96x128xf32>
    %c0_1 = arith.constant 0 : index
    %c0_2 = arith.constant 0 : index
    %1 = vector.load %arg4[%c0_1, %c0_2] : memref<1x128xf32, #tpu.memory_space<vmem>>, vector<1x128xf32>
    %c0_3 = arith.constant 0 : index
    %c0_4 = arith.constant 0 : index
    %2 = vector.load %arg5[%c0_3, %c0_4] : memref<32x128xf32, #tpu.memory_space<vmem>>, vector<32x128xf32>
    %c0_5 = arith.constant 0 : index
    %c0_6 = arith.constant 0 : index
    %3 = vector.load %arg6[%c0_5, %c0_6] : memref<1x128xf32, #tpu.memory_space<vmem>>, vector<1x128xf32>
    %c0_7 = arith.constant 0 : index
    %c0_8 = arith.constant 0 : index
    %4 = vector.load %arg2[%c0_7, %c0_8] : memref<8x1xi32, #tpu.memory_space<vmem>>, vector<8x1xi32>
    %5 = tpu.iota {dimensions = array<i32: 1>} : vector<8x64xi32>
    %cst = arith.constant 0.000000e+00 : f32
    %6 = vector.broadcast %cst : f32 to vector<8x32xf32>
    %cst_9 = arith.constant 0.000000e+00 : f32
    %7 = vector.broadcast %cst_9 : f32 to vector<8x32xf32>
    %c0_i32 = arith.constant 0 : i32
    %8 = arith.index_cast %c0_i32 : i32 to index
    %c0_10 = arith.constant 0 : index
    %c0_11 = arith.constant 0 : index
    %9 = vector.load %arg1[%8, %c0_10, %c0_11] : memref<8x8x1xi32, #tpu.memory_space<vmem>>, vector<1x8x1xi32>
    %10 = vector.shape_cast %9 : vector<1x8x1xi32> to vector<8x1xi32>
    %11 = vector.broadcast %10 : vector<8x1xi32> to vector<8x64xi32>
    %12 = arith.cmpi eq, %11, %5 : vector<8x64xi32>
    %13 = arith.extui %12 : vector<8x64xi1> to vector<8x64xi32>
    %14 = arith.sitofp %13 : vector<8x64xi32> to vector<8x64xf32>
    %15 = tpu.concatenate %14, %6 in 1 : vector<8x64xf32>, vector<8x32xf32> -> vector<8x96xf32>
    %cst_12 = arith.constant dense<0.000000e+00> : vector<8x128xf32>
    %16 = tpu.matmul %15, %0, %cst_12 {dimension_numbers = #tpu.dot_dimension_numbers<[1], [0], [0], [1], [0, 0, 1, 1], [], []>} : vector<8x96xf32>, vector<96x128xf32>, vector<8x128xf32> -> vector<8x128xf32>
    %17 = vector.broadcast %1 : vector<1x128xf32> to vector<8x128xf32>
    %18 = arith.addf %16, %17 : vector<8x128xf32>
    %19 = arith.negf %18 : vector<8x128xf32>
    %20 = math.exp %19 : vector<8x128xf32>
    %cst_13 = arith.constant 1.000000e+00 : f32
    %21 = vector.broadcast %cst_13 : f32 to vector<8x128xf32>
    %22 = arith.addf %21, %20 : vector<8x128xf32>
    %23 = arith.divf %21, %22 : vector<8x128xf32>
    %24 = math.tanh %18 : vector<8x128xf32>
    %25 = vector.extract_strided_slice %23 {offsets = [0, 0], sizes = [8, 32], strides = [1, 1]} : vector<8x128xf32> to vector<8x32xf32>
    %26 = vector.extract_strided_slice %23 {offsets = [0, 32], sizes = [8, 32], strides = [1, 1]} : vector<8x128xf32> to vector<8x32xf32>
    %27 = vector.extract_strided_slice %24 {offsets = [0, 64], sizes = [8, 32], strides = [1, 1]} : vector<8x128xf32> to vector<8x32xf32>
    %28 = vector.extract_strided_slice %23 {offsets = [0, 96], sizes = [8, 32], strides = [1, 1]} : vector<8x128xf32> to vector<8x32xf32>
    %29 = arith.mulf %26, %7 : vector<8x32xf32>
    %30 = arith.mulf %25, %27 : vector<8x32xf32>
    %31 = arith.addf %29, %30 : vector<8x32xf32>
    %32 = math.tanh %31 : vector<8x32xf32>
    %33 = arith.mulf %28, %32 : vector<8x32xf32>
    %34 = vector.broadcast %c0_i32 : i32 to vector<8x1xi32>
    %35 = arith.cmpi sgt, %4, %34 : vector<8x1xi32>
    %36 = vector.shape_cast %35 : vector<8x1xi1> to vector<8x1xi1>
    %37 = vector.broadcast %36 : vector<8x1xi1> to vector<8x32xi1>
    %38 = arith.select %37, %33, %6 : vector<8x32xi1>, vector<8x32xf32>
    %39 = vector.shape_cast %35 : vector<8x1xi1> to vector<8x1xi1>
    %40 = vector.broadcast %39 : vector<8x1xi1> to vector<8x32xi1>
    %41 = arith.select %40, %31, %7 : vector<8x32xi1>, vector<8x32xf32>
    %c1_i32 = arith.constant 1 : i32
    %42 = arith.index_cast %c1_i32 : i32 to index
    %c0_14 = arith.constant 0 : index
    %c0_15 = arith.constant 0 : index
    %43 = vector.load %arg1[%42, %c0_14, %c0_15] : memref<8x8x1xi32, #tpu.memory_space<vmem>>, vector<1x8x1xi32>
    %44 = vector.shape_cast %43 : vector<1x8x1xi32> to vector<8x1xi32>
    %45 = vector.broadcast %44 : vector<8x1xi32> to vector<8x64xi32>
    %46 = arith.cmpi eq, %45, %5 : vector<8x64xi32>
    %47 = arith.extui %46 : vector<8x64xi1> to vector<8x64xi32>
    %48 = arith.sitofp %47 : vector<8x64xi32> to vector<8x64xf32>
    %49 = tpu.concatenate %48, %38 in 1 : vector<8x64xf32>, vector<8x32xf32> -> vector<8x96xf32>
    %cst_16 = arith.constant dense<0.000000e+00> : vector<8x128xf32>
    %50 = tpu.matmul %49, %0, %cst_16 {dimension_numbers = #tpu.dot_dimension_numbers<[1], [0], [0], [1], [0, 0, 1, 1], [], []>} : vector<8x96xf32>, vector<96x128xf32>, vector<8x128xf32> -> vector<8x128xf32>
    %51 = vector.broadcast %1 : vector<1x128xf32> to vector<8x128xf32>
    %52 = arith.addf %50, %51 : vector<8x128xf32>
    %53 = arith.negf %52 : vector<8x128xf32>
    %54 = math.exp %53 : vector<8x128xf32>
    %cst_17 = arith.constant 1.000000e+00 : f32
    %55 = vector.broadcast %cst_17 : f32 to vector<8x128xf32>
    %56 = arith.addf %55, %54 : vector<8x128xf32>
    %57 = arith.divf %55, %56 : vector<8x128xf32>
    %58 = math.tanh %52 : vector<8x128xf32>
    %59 = vector.extract_strided_slice %57 {offsets = [0, 0], sizes = [8, 32], strides = [1, 1]} : vector<8x128xf32> to vector<8x32xf32>
    %60 = vector.extract_strided_slice %57 {offsets = [0, 32], sizes = [8, 32], strides = [1, 1]} : vector<8x128xf32> to vector<8x32xf32>
    %61 = vector.extract_strided_slice %58 {offsets = [0, 64], sizes = [8, 32], strides = [1, 1]} : vector<8x128xf32> to vector<8x32xf32>
    %62 = vector.extract_strided_slice %57 {offsets = [0, 96], sizes = [8, 32], strides = [1, 1]} : vector<8x128xf32> to vector<8x32xf32>
    %63 = arith.mulf %60, %41 : vector<8x32xf32>
    %64 = arith.mulf %59, %61 : vector<8x32xf32>
    %65 = arith.addf %63, %64 : vector<8x32xf32>
    %66 = math.tanh %65 : vector<8x32xf32>
    %67 = arith.mulf %62, %66 : vector<8x32xf32>
    %68 = vector.broadcast %c1_i32 : i32 to vector<8x1xi32>
    %69 = arith.cmpi sgt, %4, %68 : vector<8x1xi32>
    %70 = vector.shape_cast %69 : vector<8x1xi1> to vector<8x1xi1>
    %71 = vector.broadcast %70 : vector<8x1xi1> to vector<8x32xi1>
    %72 = arith.select %71, %67, %38 : vector<8x32xi1>, vector<8x32xf32>
    %73 = vector.shape_cast %69 : vector<8x1xi1> to vector<8x1xi1>
    %74 = vector.broadcast %73 : vector<8x1xi1> to vector<8x32xi1>
    %75 = arith.select %74, %65, %41 : vector<8x32xi1>, vector<8x32xf32>
    %c2_i32 = arith.constant 2 : i32
    %76 = arith.index_cast %c2_i32 : i32 to index
    %c0_18 = arith.constant 0 : index
    %c0_19 = arith.constant 0 : index
    %77 = vector.load %arg1[%76, %c0_18, %c0_19] : memref<8x8x1xi32, #tpu.memory_space<vmem>>, vector<1x8x1xi32>
    %78 = vector.shape_cast %77 : vector<1x8x1xi32> to vector<8x1xi32>
    %79 = vector.broadcast %78 : vector<8x1xi32> to vector<8x64xi32>
    %80 = arith.cmpi eq, %79, %5 : vector<8x64xi32>
    %81 = arith.extui %80 : vector<8x64xi1> to vector<8x64xi32>
    %82 = arith.sitofp %81 : vector<8x64xi32> to vector<8x64xf32>
    %83 = tpu.concatenate %82, %72 in 1 : vector<8x64xf32>, vector<8x32xf32> -> vector<8x96xf32>
    %cst_20 = arith.constant dense<0.000000e+00> : vector<8x128xf32>
    %84 = tpu.matmul %83, %0, %cst_20 {dimension_numbers = #tpu.dot_dimension_numbers<[1], [0], [0], [1], [0, 0, 1, 1], [], []>} : vector<8x96xf32>, vector<96x128xf32>, vector<8x128xf32> -> vector<8x128xf32>
    %85 = vector.broadcast %1 : vector<1x128xf32> to vector<8x128xf32>
    %86 = arith.addf %84, %85 : vector<8x128xf32>
    %87 = arith.negf %86 : vector<8x128xf32>
    %88 = math.exp %87 : vector<8x128xf32>
    %cst_21 = arith.constant 1.000000e+00 : f32
    %89 = vector.broadcast %cst_21 : f32 to vector<8x128xf32>
    %90 = arith.addf %89, %88 : vector<8x128xf32>
    %91 = arith.divf %89, %90 : vector<8x128xf32>
    %92 = math.tanh %86 : vector<8x128xf32>
    %93 = vector.extract_strided_slice %91 {offsets = [0, 0], sizes = [8, 32], strides = [1, 1]} : vector<8x128xf32> to vector<8x32xf32>
    %94 = vector.extract_strided_slice %91 {offsets = [0, 32], sizes = [8, 32], strides = [1, 1]} : vector<8x128xf32> to vector<8x32xf32>
    %95 = vector.extract_strided_slice %92 {offsets = [0, 64], sizes = [8, 32], strides = [1, 1]} : vector<8x128xf32> to vector<8x32xf32>
    %96 = vector.extract_strided_slice %91 {offsets = [0, 96], sizes = [8, 32], strides = [1, 1]} : vector<8x128xf32> to vector<8x32xf32>
    %97 = arith.mulf %94, %75 : vector<8x32xf32>
    %98 = arith.mulf %93, %95 : vector<8x32xf32>
    %99 = arith.addf %97, %98 : vector<8x32xf32>
    %100 = math.tanh %99 : vector<8x32xf32>
    %101 = arith.mulf %96, %100 : vector<8x32xf32>
    %102 = vector.broadcast %c2_i32 : i32 to vector<8x1xi32>
    %103 = arith.cmpi sgt, %4, %102 : vector<8x1xi32>
    %104 = vector.shape_cast %103 : vector<8x1xi1> to vector<8x1xi1>
    %105 = vector.broadcast %104 : vector<8x1xi1> to vector<8x32xi1>
    %106 = arith.select %105, %101, %72 : vector<8x32xi1>, vector<8x32xf32>
    %107 = vector.shape_cast %103 : vector<8x1xi1> to vector<8x1xi1>
    %108 = vector.broadcast %107 : vector<8x1xi1> to vector<8x32xi1>
    %109 = arith.select %108, %99, %75 : vector<8x32xi1>, vector<8x32xf32>
    %c3_i32 = arith.constant 3 : i32
    %110 = arith.index_cast %c3_i32 : i32 to index
    %c0_22 = arith.constant 0 : index
    %c0_23 = arith.constant 0 : index
    %111 = vector.load %arg1[%110, %c0_22, %c0_23] : memref<8x8x1xi32, #tpu.memory_space<vmem>>, vector<1x8x1xi32>
    %112 = vector.shape_cast %111 : vector<1x8x1xi32> to vector<8x1xi32>
    %113 = vector.broadcast %112 : vector<8x1xi32> to vector<8x64xi32>
    %114 = arith.cmpi eq, %113, %5 : vector<8x64xi32>
    %115 = arith.extui %114 : vector<8x64xi1> to vector<8x64xi32>
    %116 = arith.sitofp %115 : vector<8x64xi32> to vector<8x64xf32>
    %117 = tpu.concatenate %116, %106 in 1 : vector<8x64xf32>, vector<8x32xf32> -> vector<8x96xf32>
    %cst_24 = arith.constant dense<0.000000e+00> : vector<8x128xf32>
    %118 = tpu.matmul %117, %0, %cst_24 {dimension_numbers = #tpu.dot_dimension_numbers<[1], [0], [0], [1], [0, 0, 1, 1], [], []>} : vector<8x96xf32>, vector<96x128xf32>, vector<8x128xf32> -> vector<8x128xf32>
    %119 = vector.broadcast %1 : vector<1x128xf32> to vector<8x128xf32>
    %120 = arith.addf %118, %119 : vector<8x128xf32>
    %121 = arith.negf %120 : vector<8x128xf32>
    %122 = math.exp %121 : vector<8x128xf32>
    %cst_25 = arith.constant 1.000000e+00 : f32
    %123 = vector.broadcast %cst_25 : f32 to vector<8x128xf32>
    %124 = arith.addf %123, %122 : vector<8x128xf32>
    %125 = arith.divf %123, %124 : vector<8x128xf32>
    %126 = math.tanh %120 : vector<8x128xf32>
    %127 = vector.extract_strided_slice %125 {offsets = [0, 0], sizes = [8, 32], strides = [1, 1]} : vector<8x128xf32> to vector<8x32xf32>
    %128 = vector.extract_strided_slice %125 {offsets = [0, 32], sizes = [8, 32], strides = [1, 1]} : vector<8x128xf32> to vector<8x32xf32>
    %129 = vector.extract_strided_slice %126 {offsets = [0, 64], sizes = [8, 32], strides = [1, 1]} : vector<8x128xf32> to vector<8x32xf32>
    %130 = vector.extract_strided_slice %125 {offsets = [0, 96], sizes = [8, 32], strides = [1, 1]} : vector<8x128xf32> to vector<8x32xf32>
    %131 = arith.mulf %128, %109 : vector<8x32xf32>
    %132 = arith.mulf %127, %129 : vector<8x32xf32>
    %133 = arith.addf %131, %132 : vector<8x32xf32>
    %134 = math.tanh %133 : vector<8x32xf32>
    %135 = arith.mulf %130, %134 : vector<8x32xf32>
    %136 = vector.broadcast %c3_i32 : i32 to vector<8x1xi32>
    %137 = arith.cmpi sgt, %4, %136 : vector<8x1xi32>
    %138 = vector.shape_cast %137 : vector<8x1xi1> to vector<8x1xi1>
    %139 = vector.broadcast %138 : vector<8x1xi1> to vector<8x32xi1>
    %140 = arith.select %139, %135, %106 : vector<8x32xi1>, vector<8x32xf32>
    %141 = vector.shape_cast %137 : vector<8x1xi1> to vector<8x1xi1>
    %142 = vector.broadcast %141 : vector<8x1xi1> to vector<8x32xi1>
    %143 = arith.select %142, %133, %109 : vector<8x32xi1>, vector<8x32xf32>
    %c4_i32 = arith.constant 4 : i32
    %144 = arith.index_cast %c4_i32 : i32 to index
    %c0_26 = arith.constant 0 : index
    %c0_27 = arith.constant 0 : index
    %145 = vector.load %arg1[%144, %c0_26, %c0_27] : memref<8x8x1xi32, #tpu.memory_space<vmem>>, vector<1x8x1xi32>
    %146 = vector.shape_cast %145 : vector<1x8x1xi32> to vector<8x1xi32>
    %147 = vector.broadcast %146 : vector<8x1xi32> to vector<8x64xi32>
    %148 = arith.cmpi eq, %147, %5 : vector<8x64xi32>
    %149 = arith.extui %148 : vector<8x64xi1> to vector<8x64xi32>
    %150 = arith.sitofp %149 : vector<8x64xi32> to vector<8x64xf32>
    %151 = tpu.concatenate %150, %140 in 1 : vector<8x64xf32>, vector<8x32xf32> -> vector<8x96xf32>
    %cst_28 = arith.constant dense<0.000000e+00> : vector<8x128xf32>
    %152 = tpu.matmul %151, %0, %cst_28 {dimension_numbers = #tpu.dot_dimension_numbers<[1], [0], [0], [1], [0, 0, 1, 1], [], []>} : vector<8x96xf32>, vector<96x128xf32>, vector<8x128xf32> -> vector<8x128xf32>
    %153 = vector.broadcast %1 : vector<1x128xf32> to vector<8x128xf32>
    %154 = arith.addf %152, %153 : vector<8x128xf32>
    %155 = arith.negf %154 : vector<8x128xf32>
    %156 = math.exp %155 : vector<8x128xf32>
    %cst_29 = arith.constant 1.000000e+00 : f32
    %157 = vector.broadcast %cst_29 : f32 to vector<8x128xf32>
    %158 = arith.addf %157, %156 : vector<8x128xf32>
    %159 = arith.divf %157, %158 : vector<8x128xf32>
    %160 = math.tanh %154 : vector<8x128xf32>
    %161 = vector.extract_strided_slice %159 {offsets = [0, 0], sizes = [8, 32], strides = [1, 1]} : vector<8x128xf32> to vector<8x32xf32>
    %162 = vector.extract_strided_slice %159 {offsets = [0, 32], sizes = [8, 32], strides = [1, 1]} : vector<8x128xf32> to vector<8x32xf32>
    %163 = vector.extract_strided_slice %160 {offsets = [0, 64], sizes = [8, 32], strides = [1, 1]} : vector<8x128xf32> to vector<8x32xf32>
    %164 = vector.extract_strided_slice %159 {offsets = [0, 96], sizes = [8, 32], strides = [1, 1]} : vector<8x128xf32> to vector<8x32xf32>
    %165 = arith.mulf %162, %143 : vector<8x32xf32>
    %166 = arith.mulf %161, %163 : vector<8x32xf32>
    %167 = arith.addf %165, %166 : vector<8x32xf32>
    %168 = math.tanh %167 : vector<8x32xf32>
    %169 = arith.mulf %164, %168 : vector<8x32xf32>
    %170 = vector.broadcast %c4_i32 : i32 to vector<8x1xi32>
    %171 = arith.cmpi sgt, %4, %170 : vector<8x1xi32>
    %172 = vector.shape_cast %171 : vector<8x1xi1> to vector<8x1xi1>
    %173 = vector.broadcast %172 : vector<8x1xi1> to vector<8x32xi1>
    %174 = arith.select %173, %169, %140 : vector<8x32xi1>, vector<8x32xf32>
    %175 = vector.shape_cast %171 : vector<8x1xi1> to vector<8x1xi1>
    %176 = vector.broadcast %175 : vector<8x1xi1> to vector<8x32xi1>
    %177 = arith.select %176, %167, %143 : vector<8x32xi1>, vector<8x32xf32>
    %c5_i32 = arith.constant 5 : i32
    %178 = arith.index_cast %c5_i32 : i32 to index
    %c0_30 = arith.constant 0 : index
    %c0_31 = arith.constant 0 : index
    %179 = vector.load %arg1[%178, %c0_30, %c0_31] : memref<8x8x1xi32, #tpu.memory_space<vmem>>, vector<1x8x1xi32>
    %180 = vector.shape_cast %179 : vector<1x8x1xi32> to vector<8x1xi32>
    %181 = vector.broadcast %180 : vector<8x1xi32> to vector<8x64xi32>
    %182 = arith.cmpi eq, %181, %5 : vector<8x64xi32>
    %183 = arith.extui %182 : vector<8x64xi1> to vector<8x64xi32>
    %184 = arith.sitofp %183 : vector<8x64xi32> to vector<8x64xf32>
    %185 = tpu.concatenate %184, %174 in 1 : vector<8x64xf32>, vector<8x32xf32> -> vector<8x96xf32>
    %cst_32 = arith.constant dense<0.000000e+00> : vector<8x128xf32>
    %186 = tpu.matmul %185, %0, %cst_32 {dimension_numbers = #tpu.dot_dimension_numbers<[1], [0], [0], [1], [0, 0, 1, 1], [], []>} : vector<8x96xf32>, vector<96x128xf32>, vector<8x128xf32> -> vector<8x128xf32>
    %187 = vector.broadcast %1 : vector<1x128xf32> to vector<8x128xf32>
    %188 = arith.addf %186, %187 : vector<8x128xf32>
    %189 = arith.negf %188 : vector<8x128xf32>
    %190 = math.exp %189 : vector<8x128xf32>
    %cst_33 = arith.constant 1.000000e+00 : f32
    %191 = vector.broadcast %cst_33 : f32 to vector<8x128xf32>
    %192 = arith.addf %191, %190 : vector<8x128xf32>
    %193 = arith.divf %191, %192 : vector<8x128xf32>
    %194 = math.tanh %188 : vector<8x128xf32>
    %195 = vector.extract_strided_slice %193 {offsets = [0, 0], sizes = [8, 32], strides = [1, 1]} : vector<8x128xf32> to vector<8x32xf32>
    %196 = vector.extract_strided_slice %193 {offsets = [0, 32], sizes = [8, 32], strides = [1, 1]} : vector<8x128xf32> to vector<8x32xf32>
    %197 = vector.extract_strided_slice %194 {offsets = [0, 64], sizes = [8, 32], strides = [1, 1]} : vector<8x128xf32> to vector<8x32xf32>
    %198 = vector.extract_strided_slice %193 {offsets = [0, 96], sizes = [8, 32], strides = [1, 1]} : vector<8x128xf32> to vector<8x32xf32>
    %199 = arith.mulf %196, %177 : vector<8x32xf32>
    %200 = arith.mulf %195, %197 : vector<8x32xf32>
    %201 = arith.addf %199, %200 : vector<8x32xf32>
    %202 = math.tanh %201 : vector<8x32xf32>
    %203 = arith.mulf %198, %202 : vector<8x32xf32>
    %204 = vector.broadcast %c5_i32 : i32 to vector<8x1xi32>
    %205 = arith.cmpi sgt, %4, %204 : vector<8x1xi32>
    %206 = vector.shape_cast %205 : vector<8x1xi1> to vector<8x1xi1>
    %207 = vector.broadcast %206 : vector<8x1xi1> to vector<8x32xi1>
    %208 = arith.select %207, %203, %174 : vector<8x32xi1>, vector<8x32xf32>
    %209 = vector.shape_cast %205 : vector<8x1xi1> to vector<8x1xi1>
    %210 = vector.broadcast %209 : vector<8x1xi1> to vector<8x32xi1>
    %211 = arith.select %210, %201, %177 : vector<8x32xi1>, vector<8x32xf32>
    %c6_i32 = arith.constant 6 : i32
    %212 = arith.index_cast %c6_i32 : i32 to index
    %c0_34 = arith.constant 0 : index
    %c0_35 = arith.constant 0 : index
    %213 = vector.load %arg1[%212, %c0_34, %c0_35] : memref<8x8x1xi32, #tpu.memory_space<vmem>>, vector<1x8x1xi32>
    %214 = vector.shape_cast %213 : vector<1x8x1xi32> to vector<8x1xi32>
    %215 = vector.broadcast %214 : vector<8x1xi32> to vector<8x64xi32>
    %216 = arith.cmpi eq, %215, %5 : vector<8x64xi32>
    %217 = arith.extui %216 : vector<8x64xi1> to vector<8x64xi32>
    %218 = arith.sitofp %217 : vector<8x64xi32> to vector<8x64xf32>
    %219 = tpu.concatenate %218, %208 in 1 : vector<8x64xf32>, vector<8x32xf32> -> vector<8x96xf32>
    %cst_36 = arith.constant dense<0.000000e+00> : vector<8x128xf32>
    %220 = tpu.matmul %219, %0, %cst_36 {dimension_numbers = #tpu.dot_dimension_numbers<[1], [0], [0], [1], [0, 0, 1, 1], [], []>} : vector<8x96xf32>, vector<96x128xf32>, vector<8x128xf32> -> vector<8x128xf32>
    %221 = vector.broadcast %1 : vector<1x128xf32> to vector<8x128xf32>
    %222 = arith.addf %220, %221 : vector<8x128xf32>
    %223 = arith.negf %222 : vector<8x128xf32>
    %224 = math.exp %223 : vector<8x128xf32>
    %cst_37 = arith.constant 1.000000e+00 : f32
    %225 = vector.broadcast %cst_37 : f32 to vector<8x128xf32>
    %226 = arith.addf %225, %224 : vector<8x128xf32>
    %227 = arith.divf %225, %226 : vector<8x128xf32>
    %228 = math.tanh %222 : vector<8x128xf32>
    %229 = vector.extract_strided_slice %227 {offsets = [0, 0], sizes = [8, 32], strides = [1, 1]} : vector<8x128xf32> to vector<8x32xf32>
    %230 = vector.extract_strided_slice %227 {offsets = [0, 32], sizes = [8, 32], strides = [1, 1]} : vector<8x128xf32> to vector<8x32xf32>
    %231 = vector.extract_strided_slice %228 {offsets = [0, 64], sizes = [8, 32], strides = [1, 1]} : vector<8x128xf32> to vector<8x32xf32>
    %232 = vector.extract_strided_slice %227 {offsets = [0, 96], sizes = [8, 32], strides = [1, 1]} : vector<8x128xf32> to vector<8x32xf32>
    %233 = arith.mulf %230, %211 : vector<8x32xf32>
    %234 = arith.mulf %229, %231 : vector<8x32xf32>
    %235 = arith.addf %233, %234 : vector<8x32xf32>
    %236 = math.tanh %235 : vector<8x32xf32>
    %237 = arith.mulf %232, %236 : vector<8x32xf32>
    %238 = vector.broadcast %c6_i32 : i32 to vector<8x1xi32>
    %239 = arith.cmpi sgt, %4, %238 : vector<8x1xi32>
    %240 = vector.shape_cast %239 : vector<8x1xi1> to vector<8x1xi1>
    %241 = vector.broadcast %240 : vector<8x1xi1> to vector<8x32xi1>
    %242 = arith.select %241, %237, %208 : vector<8x32xi1>, vector<8x32xf32>
    %243 = vector.shape_cast %239 : vector<8x1xi1> to vector<8x1xi1>
    %244 = vector.broadcast %243 : vector<8x1xi1> to vector<8x32xi1>
    %245 = arith.select %244, %235, %211 : vector<8x32xi1>, vector<8x32xf32>
    %c7_i32 = arith.constant 7 : i32
    %246 = arith.index_cast %c7_i32 : i32 to index
    %c0_38 = arith.constant 0 : index
    %c0_39 = arith.constant 0 : index
    %247 = vector.load %arg1[%246, %c0_38, %c0_39] : memref<8x8x1xi32, #tpu.memory_space<vmem>>, vector<1x8x1xi32>
    %248 = vector.shape_cast %247 : vector<1x8x1xi32> to vector<8x1xi32>
    %249 = vector.broadcast %248 : vector<8x1xi32> to vector<8x64xi32>
    %250 = arith.cmpi eq, %249, %5 : vector<8x64xi32>
    %251 = arith.extui %250 : vector<8x64xi1> to vector<8x64xi32>
    %252 = arith.sitofp %251 : vector<8x64xi32> to vector<8x64xf32>
    %253 = tpu.concatenate %252, %242 in 1 : vector<8x64xf32>, vector<8x32xf32> -> vector<8x96xf32>
    %cst_40 = arith.constant dense<0.000000e+00> : vector<8x128xf32>
    %254 = tpu.matmul %253, %0, %cst_40 {dimension_numbers = #tpu.dot_dimension_numbers<[1], [0], [0], [1], [0, 0, 1, 1], [], []>} : vector<8x96xf32>, vector<96x128xf32>, vector<8x128xf32> -> vector<8x128xf32>
    %255 = vector.broadcast %1 : vector<1x128xf32> to vector<8x128xf32>
    %256 = arith.addf %254, %255 : vector<8x128xf32>
    %257 = arith.negf %256 : vector<8x128xf32>
    %258 = math.exp %257 : vector<8x128xf32>
    %cst_41 = arith.constant 1.000000e+00 : f32
    %259 = vector.broadcast %cst_41 : f32 to vector<8x128xf32>
    %260 = arith.addf %259, %258 : vector<8x128xf32>
    %261 = arith.divf %259, %260 : vector<8x128xf32>
    %262 = math.tanh %256 : vector<8x128xf32>
    %263 = vector.extract_strided_slice %261 {offsets = [0, 0], sizes = [8, 32], strides = [1, 1]} : vector<8x128xf32> to vector<8x32xf32>
    %264 = vector.extract_strided_slice %261 {offsets = [0, 32], sizes = [8, 32], strides = [1, 1]} : vector<8x128xf32> to vector<8x32xf32>
    %265 = vector.extract_strided_slice %262 {offsets = [0, 64], sizes = [8, 32], strides = [1, 1]} : vector<8x128xf32> to vector<8x32xf32>
    %266 = vector.extract_strided_slice %261 {offsets = [0, 96], sizes = [8, 32], strides = [1, 1]} : vector<8x128xf32> to vector<8x32xf32>
    %267 = arith.mulf %264, %245 : vector<8x32xf32>
    %268 = arith.mulf %263, %265 : vector<8x32xf32>
    %269 = arith.addf %267, %268 : vector<8x32xf32>
    %270 = math.tanh %269 : vector<8x32xf32>
    %271 = arith.mulf %266, %270 : vector<8x32xf32>
    %272 = vector.broadcast %c7_i32 : i32 to vector<8x1xi32>
    %273 = arith.cmpi sgt, %4, %272 : vector<8x1xi32>
    %274 = vector.shape_cast %273 : vector<8x1xi1> to vector<8x1xi1>
    %275 = vector.broadcast %274 : vector<8x1xi1> to vector<8x32xi1>
    %276 = arith.select %275, %271, %242 : vector<8x32xi1>, vector<8x32xf32>
    %277 = vector.shape_cast %273 : vector<8x1xi1> to vector<8x1xi1>
    %278 = vector.broadcast %277 : vector<8x1xi1> to vector<8x32xi1>
    %279 = arith.select %278, %269, %245 : vector<8x32xi1>, vector<8x32xf32>
    %c8_i32 = arith.constant 8 : i32
    %cst_42 = arith.constant dense<0.000000e+00> : vector<8x128xf32>
    %280 = tpu.matmul %276, %2, %cst_42 {dimension_numbers = #tpu.dot_dimension_numbers<[1], [0], [0], [1], [0, 0, 1, 1], [], []>} : vector<8x32xf32>, vector<32x128xf32>, vector<8x128xf32> -> vector<8x128xf32>
    %281 = vector.broadcast %3 : vector<1x128xf32> to vector<8x128xf32>
    %282 = arith.addf %280, %281 : vector<8x128xf32>
    %c0_43 = arith.constant 0 : index
    %c0_44 = arith.constant 0 : index
    %283 = vector.load %arg7[%c0_43, %c0_44] : memref<8x128xf32, #tpu.memory_space<vmem>>, vector<8x128xf32>
    tpu.vector_store %arg7[%c0_43, %c0_44], %282 {strides = array<i32>} : memref<8x128xf32, #tpu.memory_space<vmem>>, vector<8x128xf32>,
    return
  }
  func.func @transform_0(%arg0: i32) -> (i32, i32, i32) {
    %c0_i32 = arith.constant 0 : i32
    %c0_i32_0 = arith.constant 0 : i32
    %c0_i32_1 = arith.constant 0 : i32
    %c0_i32_2 = arith.constant 0 : i32
    return %c0_i32, %c0_i32_0, %c0_i32_1 : i32, i32, i32
  }
  func.func @transform_1(%arg0: i32) -> (i32, i32) {
    %c0_i32 = arith.constant 0 : i32
    %c0_i32_0 = arith.constant 0 : i32
    %c0_i32_1 = arith.constant 0 : i32
    return %c0_i32, %c0_i32_0 : i32, i32
  }
  func.func @transform_2(%arg0: i32) -> (i32, i32) {
    %c0_i32 = arith.constant 0 : i32
    %c0_i32_0 = arith.constant 0 : i32
    %c0_i32_1 = arith.constant 0 : i32
    return %c0_i32, %c0_i32_0 : i32, i32
  }
  func.func @transform_3(%arg0: i32) -> (i32, i32) {
    %c0_i32 = arith.constant 0 : i32
    %c0_i32_0 = arith.constant 0 : i32
    %c0_i32_1 = arith.constant 0 : i32
    return %c0_i32, %c0_i32_0 : i32, i32
  }
  func.func @transform_4(%arg0: i32) -> (i32, i32) {
    %c0_i32 = arith.constant 0 : i32
    %c0_i32_0 = arith.constant 0 : i32
    %c0_i32_1 = arith.constant 0 : i32
    return %c0_i32, %c0_i32_0 : i32, i32
  }
  func.func @transform_5(%arg0: i32) -> (i32, i32) {
    %c0_i32 = arith.constant 0 : i32
    %c0_i32_0 = arith.constant 0 : i32
    %c0_i32_1 = arith.constant 0 : i32
    return %c0_i32, %c0_i32_0 : i32, i32
  }
  func.func @transform_6(%arg0: i32) -> (i32, i32) {
    %c0_i32 = arith.constant 0 : i32
    %c0_i32_0 = arith.constant 0 : i32
    %c0_i32_1 = arith.constant 0 : i32
    return %c0_i32, %c0_i32_0 : i32, i32
  }
}

</mosaic_0001>

<llo_original>
// kernel: tpu_custom_call.1
$region0: #{tpu_custom_call.1}
  #allocation0 [shape = 'u32[]', space=smem, size = 0x4, offset = 0x4, fixed_abs, tag = 'smem constant byte address 0x4 - core index']
  #allocation1 [shape = 'u32[144,128]{1,0:T(1,128)}', space=vmem, size = 0x12000, scoped, tag = 'internal scratch']
  %s0 = inlined_call_operand.vmem [shape: s32[8,8,1], index: 0, kind: input, shape index: {}]
  %s1 = inlined_call_operand.vmem [shape: s32[8,1], index: 1, kind: input, shape index: {}]
  %s2 = inlined_call_operand.hbm [shape: f32[96,128], index: 2, kind: input, shape index: {}]
  %s3 = inlined_call_operand.vmem [shape: f32[1,128], index: 3, kind: input, shape index: {}]
  %s4 = inlined_call_operand.vmem [shape: f32[32,128], index: 4, kind: input, shape index: {}]
  %s5 = inlined_call_operand.vmem [shape: f32[1,128], index: 5, kind: input, shape index: {}]
  %s6 = inlined_call_operand.hbm [shape: f32[8,128], index: 6, kind: output, shape index: {}]
  %s7 = sld [smem:[#allocation0]]
  $region38: #{tpu_custom_call.1} parent=0
    _
  %s9 = ssub.s32 1, %s7
  %s10 = scalar_select 0, %s9, %s7
  $region1: #{tpu_custom_call.1} parent=0
    #allocation2 [shape = 'u8[49152]{0}', space=vmem, size = 0xc000, scoped, tag = 'input window, operand 2, single buffered']
    #allocation3 [shape = 's32[1]{0}', space=sflag, size = 0x4, scoped, tag = 'scoped memory for tpu_custom_call.1']
    #allocation4 [shape = 's32[1]{0}', space=sflag, size = 0x4, scoped, tag = 'scoped memory for tpu_custom_call.1']
    #allocation5 [shape = 'u8[4096]{0}', space=vmem, size = 0x1000, scoped, tag = 'output window, operand 0, single buffered']
    %11 = vsyncpa [#allocation3], 0
    %12 = vsyncpa [#allocation4], 0
    // Predicated region
    $region2: #{tpu_custom_call.1} parent=1 // pred_check
      _
    $region3: #{tpu_custom_call.1} parent=1 // pred_check_branch
      %14 = sbr.rel (0) target = $region5
    $region4: #{tpu_custom_call.1} parent=1 // pred_region
      _
    $region5: #{tpu_custom_call.1} parent=1 // pred_fallthru
      _
    // Predicated region
    $region6: #{tpu_custom_call.1} parent=1 // pred_check
      _
    $region7: #{tpu_custom_call.1} parent=1 // pred_check_branch
      %16 = sbr.rel (0) target = $region9
    $region8: #{tpu_custom_call.1} parent=1 // pred_region
      _
    $region9: #{tpu_custom_call.1} parent=1 // pred_fallthru
      _
    // Predicated region
    $region10: #{tpu_custom_call.1} parent=1 // pred_check
      _
    $region11: #{tpu_custom_call.1} parent=1 // pred_check_branch
      %18 = sbr.rel (0) target = $region13
    $region12: #{tpu_custom_call.1} parent=1 // pred_region
      %s20 = ssub.s32 1536, 1536
      %21 = vsyncadd [#allocation3], %s20
      %s22 = sshll.u32 [#allocation2], 4
      %s23 = int_to_ptr.vmem [resolvable:$true] %s22
      %28 = dma.hbm_to_vmem [thread:$0]  %s2, 1536, %s23, [#allocation3], 128, 128, 8
    $region13: #{tpu_custom_call.1} parent=1 // pred_fallthru
      _
    // Predicated region
    $region14: #{tpu_custom_call.1} parent=1 // pred_check
      _
    $region15: #{tpu_custom_call.1} parent=1 // pred_check_branch
      %30 = sbr.rel (0) target = $region17
    $region16: #{tpu_custom_call.1} parent=1 // pred_region
      _
    $region17: #{tpu_custom_call.1} parent=1 // pred_fallthru
      _
    // Predicated region
    $region18: #{tpu_custom_call.1} parent=1 // pred_check
      _
    $region19: #{tpu_custom_call.1} parent=1 // pred_check_branch
      %32 = sbr.rel (0) target = $region21
    $region20: #{tpu_custom_call.1} parent=1 // pred_region
      _
    $region21: #{tpu_custom_call.1} parent=1 // pred_fallthru
      _
    // Predicated region
    $region22: #{tpu_custom_call.1} parent=1 // pred_check
      _
    $region23: #{tpu_custom_call.1} parent=1 // pred_check_branch
      %34 = sbr.rel (0) target = $region25
    $region24: #{tpu_custom_call.1} parent=1 // pred_region
      _
    $region25: #{tpu_custom_call.1} parent=1 // pred_fallthru
      _
    // Predicated region
    $region26: #{tpu_custom_call.1} parent=1 // pred_check
      _
    $region27: #{tpu_custom_call.1} parent=1 // pred_check_branch
      %36 = sbr.rel (0) target = $region29
    $region28: #{tpu_custom_call.1} parent=1 // pred_region
      %37 = dma.done [#allocation3], 1536
    $region29: #{tpu_custom_call.1} parent=1 // pred_fallthru
      _
    %v38 = vld [vmem:[#allocation2] sm:$0xff]
    %v39 = vld [vmem:[#allocation2 + $0x8] sm:$0xff]
    %v40 = vld [vmem:[#allocation2 + $0x10] sm:$0xff]
    %v41 = vld [vmem:[#allocation2 + $0x18] sm:$0xff]
    %v42 = vld [vmem:[#allocation2 + $0x20] sm:$0xff]
    %v43 = vld [vmem:[#allocation2 + $0x28] sm:$0xff]
    %v44 = vld [vmem:[#allocation2 + $0x30] sm:$0xff]
    %v45 = vld [vmem:[#allocation2 + $0x38] sm:$0xff]
    %v46 = vld [vmem:[#allocation2 + $0x40] sm:$0xff]
    %v47 = vld [vmem:[#allocation2 + $0x48] sm:$0xff]
    %v48 = vld [vmem:[#allocation2 + $0x50] sm:$0xff]
    %v49 = vld [vmem:[#allocation2 + $0x58] sm:$0xff]
    %v50 = vld [vmem:[%s3] sm:$0x1]
    %v51 = vld [vmem:[%s4] sm:$0xff]
    %v52 = vld [vmem:[%s4 + $0x8] sm:$0xff]
    %v53 = vld [vmem:[%s4 + $0x10] sm:$0xff]
    %v54 = vld [vmem:[%s4 + $0x18] sm:$0xff]
    %v55 = vld [vmem:[%s5] sm:$0x1]
    %v56 = vld [vmem:[%s1] sm:$0xff]
    %v57 = vlaneseq
    %v58 = vand.u32 %v57, 127
    %v59 = vld [vmem:[%s0] sm:$0xff]
    %60 = vset.pattern.permute.xlu0 0
    %61 = vperm.xlu0 %60, %v59
    %v62 = vpop.permute.xlu0 %61
    %vm63 = vcmp.eq.s32.totalorder %v62, %v58
    %v64 = vsel %vm63, 1, 0
    %v65 = vcvt.s32.f32 %v64
    %vm66 = vcmask 523264
    %v67 = vsel %vm66, %v65, 0.0
    %v69 = vlaneseq
    %v70 = vshrl.u32 %v69, 7
    %v71 = vsub.s32 0, %v70
    %v72 = vrot.slane %v50, %v71
    %vm74 = vcmask 785408
    %v76 = vsel %vm74, %v67, 0
    %78 = vmatprep.subr.mxu0 0.0
    %79 = vmatpush1.msra.mxu0 0.0
    %80 = vmatprep.subr.mxu0 0.0
    %81 = vmatpush1.msra.mxu0 0.0
    %82 = vmatprep.subr.mxu0 0.0
    %83 = vmatpush1.msra.mxu0 0.0
    %84 = vmatprep.subr.mxu0 0.0
    %85 = vmatpush1.msra.mxu0 0.0
    %86 = vmatprep.subr.mxu0 0.0
    %87 = vmatpush1.msra.mxu0 %v49
    %88 = vmatprep.subr.mxu0 0.0
    %89 = vmatpush1.msra.mxu0 %v48
    %90 = vmatprep.subr.mxu0 0.0
    %91 = vmatpush1.msra.mxu0 %v47
    %92 = vmatprep.subr.mxu0 0.0
    %93 = vmatpush1.msra.mxu0 %v46
    %94 = vmatprep.subr.mxu0 0.0
    %95 = vmatpush1.msra.mxu0 %v45
    %96 = vmatprep.subr.mxu0 0.0
    %97 = vmatpush1.msra.mxu0 %v44
    %98 = vmatprep.subr.mxu0 0.0
    %99 = vmatpush1.msra.mxu0 %v43
    %100 = vmatprep.subr.mxu0 0.0
    %101 = vmatpush1.msra.mxu0 %v42
    %102 = vmatprep.subr.mxu0 0.0
    %103 = vmatpush1.msra.mxu0 %v41
    %104 = vmatprep.subr.mxu0 0.0
    %105 = vmatpush1.msra.mxu0 %v40
    %106 = vmatprep.subr.mxu0 0.0
    %107 = vmatpush1.msra.mxu0 %v39
    %108 = vmatprep.subr.mxu0 0.0
    %109 = vmatpush1.msra.mxu0 %v38
    %110 = vmatprep.subr.mxu0 0.0
    %111 = vmatpush2.msra.mxu0 0.0
    %112 = vmatprep.subr.mxu0 0.0
    %113 = vmatpush2.msra.mxu0 0.0
    %114 = vmatprep.subr.mxu0 0.0
    %115 = vmatpush2.msra.mxu0 0.0
    %116 = vmatprep.subr.mxu0 0.0
    %117 = vmatpush2.msra.mxu0 0.0
    %118 = vmatprep.subr.mxu0 0.0
    %119 = vmatpush2.msra.mxu0 0.0
    %120 = vmatprep.subr.mxu0 0.0
    %121 = vmatpush2.msra.mxu0 0.0
    %122 = vmatprep.subr.mxu0 0.0
    %123 = vmatpush2.msra.mxu0 0.0
    %124 = vmatprep.subr.mxu0 0.0
    %125 = vmatpush2.msra.mxu0 0.0
    %126 = vmatprep.subr.mxu0 0.0
    %127 = vmatpush2.msra.mxu0 0.0
    %128 = vmatprep.subr.mxu0 0.0
    %129 = vmatpush2.msra.mxu0 0.0
    %130 = vmatprep.subr.mxu0 0.0
    %131 = vmatpush2.msra.mxu0 0.0
    %132 = vmatprep.subr.mxu0 0.0
    %133 = vmatpush2.msra.mxu0 0.0
    %134 = vmatprep.subr.mxu0 0.0
    %135 = vmatpush2.msra.mxu0 0.0
    %136 = vmatprep.subr.mxu0 0.0
    %137 = vmatpush2.msra.mxu0 0.0
    %138 = vmatprep.subr.mxu0 0.0
    %139 = vmatpush2.msra.mxu0 0.0
    %140 = vmatprep.subr.mxu0 0.0
    %141 = vmatpush2.msra.mxu0 0.0
    %142 = vmatprep.mubr.f32.mxu0 0.0
    %143 = vmatmul.mubr.f32.gmra.mxu0 %v76
    %v144 = vpop.f32.mrf.mxu0
    %v145 = vadd.f32 %v72, %v144
    %v146 = vpop.f32.mrf.mxu0
    %147 = vdwg.mxu0
    %v148 = vxor.u32 %v145, 2147483648
    %v149 = vmul.f32 %v148, 1.442695
    %v150 = vpow.pop %v149
    %v151 = vadd.f32 %v150, 1.0
    %v152 = vrcp.pop %v151
    %v153 = vmul.f32 1.0, %v152
    %v154 = vtanh.pop %v145
    %v155 = vmul.f32 %v153, 0.0
    %157 = vrot.lane.b32.xlu0 %v154, 64
    %v158 = vpop.permute.xlu0 %157
    %v160 = vmul.f32 %v153, %v158
    %162 = vrot.lane.b32.xlu0 %v160, 32
    %v163 = vpop.permute.xlu0 %162
    %v165 = vadd.f32 %v155, %v163
    %v166 = vtanh.pop %v165
    %168 = vrot.lane.b32.xlu0 %v166, 64
    %v169 = vpop.permute.xlu0 %168
    %v171 = vmul.f32 %v153, %v169
    %vm172 = vcmp.gt.s32.totalorder %v56, 0
    %v173 = vsel %vm172, 1, 0
    %174 = vset.pattern.permute.xlu0 0
    %175 = vperm.xlu0 %174, %v173
    %v176 = vpop.permute.xlu0 %175
    %vm177 = vcmp.eq.s32.totalorder %v176, 1
    %v178 = vsel %vm177, %v171, 0.0
    %v179 = vsel %vm177, %v165, 0.0
    %s180 = scalar_lea.vmem %s0, 8
    %v181 = vld [vmem:[%s180] sm:$0xff]
    %182 = vset.pattern.permute.xlu0 0
    %183 = vperm.xlu0 %182, %v181
    %v184 = vpop.permute.xlu0 %183
    %vm185 = vcmp.eq.s32.totalorder %v184, %v58
    %v186 = vsel %vm185, 1, 0
    %v187 = vcvt.s32.f32 %v186
    %189 = vrot.lane.b32.xlu0 %v178, 96
    %v190 = vpop.permute.xlu0 %189
    %v192 = vsel %vm66, %v187, %v190
    %v194 = vsel %vm74, %v192, 0
    %196 = vmatprep.subr.mxu0 0.0
    %197 = vmatpush1.msra.mxu0 0.0
    %198 = vmatprep.subr.mxu0 0.0
    %199 = vmatpush1.msra.mxu0 0.0
    %200 = vmatprep.subr.mxu0 0.0
    %201 = vmatpush1.msra.mxu0 0.0
    %202 = vmatprep.subr.mxu0 0.0
    %203 = vmatpush1.msra.mxu0 0.0
    %204 = vmatprep.subr.mxu0 0.0
    %205 = vmatpush1.msra.mxu0 %v49
    %206 = vmatprep.subr.mxu0 0.0
    %207 = vmatpush1.msra.mxu0 %v48
    %208 = vmatprep.subr.mxu0 0.0
    %209 = vmatpush1.msra.mxu0 %v47
    %210 = vmatprep.subr.mxu0 0.0
    %211 = vmatpush1.msra.mxu0 %v46
    %212 = vmatprep.subr.mxu0 0.0
    %213 = vmatpush1.msra.mxu0 %v45
    %214 = vmatprep.subr.mxu0 0.0
    %215 = vmatpush1.msra.mxu0 %v44
    %216 = vmatprep.subr.mxu0 0.0
    %217 = vmatpush1.msra.mxu0 %v43
    %218 = vmatprep.subr.mxu0 0.0
    %219 = vmatpush1.msra.mxu0 %v42
    %220 = vmatprep.subr.mxu0 0.0
    %221 = vmatpush1.msra.mxu0 %v41
    %222 = vmatprep.subr.mxu0 0.0
    %223 = vmatpush1.msra.mxu0 %v40
    %224 = vmatprep.subr.mxu0 0.0
    %225 = vmatpush1.msra.mxu0 %v39
    %226 = vmatprep.subr.mxu0 0.0
    %227 = vmatpush1.msra.mxu0 %v38
    %228 = vmatprep.subr.mxu0 0.0
    %229 = vmatpush2.msra.mxu0 0.0
    %230 = vmatprep.subr.mxu0 0.0
    %231 = vmatpush2.msra.mxu0 0.0
    %232 = vmatprep.subr.mxu0 0.0
    %233 = vmatpush2.msra.mxu0 0.0
    %234 = vmatprep.subr.mxu0 0.0
    %235 = vmatpush2.msra.mxu0 0.0
    %236 = vmatprep.subr.mxu0 0.0
    %237 = vmatpush2.msra.mxu0 0.0
    %238 = vmatprep.subr.mxu0 0.0
    %239 = vmatpush2.msra.mxu0 0.0
    %240 = vmatprep.subr.mxu0 0.0
    %241 = vmatpush2.msra.mxu0 0.0
    %242 = vmatprep.subr.mxu0 0.0
    %243 = vmatpush2.msra.mxu0 0.0
    %244 = vmatprep.subr.mxu0 0.0
    %245 = vmatpush2.msra.mxu0 0.0
    %246 = vmatprep.subr.mxu0 0.0
    %247 = vmatpush2.msra.mxu0 0.0
    %248 = vmatprep.subr.mxu0 0.0
    %249 = vmatpush2.msra.mxu0 0.0
    %250 = vmatprep.subr.mxu0 0.0
    %251 = vmatpush2.msra.mxu0 0.0
    %252 = vmatprep.subr.mxu0 0.0
    %253 = vmatpush2.msra.mxu0 0.0
    %254 = vmatprep.subr.mxu0 0.0
    %255 = vmatpush2.msra.mxu0 0.0
    %256 = vmatprep.subr.mxu0 0.0
    %257 = vmatpush2.msra.mxu0 0.0
    %258 = vmatprep.subr.mxu0 0.0
    %259 = vmatpush2.msra.mxu0 0.0
    %260 = vmatprep.mubr.f32.mxu0 0.0
    %261 = vmatmul.mubr.f32.gmra.mxu0 %v194
    %v262 = vpop.f32.mrf.mxu0
    %v263 = vadd.f32 %v72, %v262
    %v264 = vpop.f32.mrf.mxu0
    %265 = vdwg.mxu0
    %v266 = vxor.u32 %v263, 2147483648
    %v267 = vmul.f32 %v266, 1.442695
    %v268 = vpow.pop %v267
    %v269 = vadd.f32 %v268, 1.0
    %v270 = vrcp.pop %v269
    %v271 = vmul.f32 1.0, %v270
    %v272 = vtanh.pop %v263
    %v273 = vmul.f32 %v271, %v179
    %275 = vrot.lane.b32.xlu0 %v272, 64
    %v276 = vpop.permute.xlu0 %275
    %v278 = vmul.f32 %v271, %v276
    %280 = vrot.lane.b32.xlu0 %v278, 32
    %v281 = vpop.permute.xlu0 %280
    %v283 = vadd.f32 %v273, %v281
    %v284 = vtanh.pop %v283
    %286 = vrot.lane.b32.xlu0 %v284, 64
    %v287 = vpop.permute.xlu0 %286
    %v289 = vmul.f32 %v271, %v287
    %vm290 = vcmp.gt.s32.totalorder %v56, 1
    %v291 = vsel %vm290, 1, 0
    %292 = vset.pattern.permute.xlu0 0
    %293 = vperm.xlu0 %292, %v291
    %v294 = vpop.permute.xlu0 %293
    %vm295 = vcmp.eq.s32.totalorder %v294, 1
    %v296 = vsel %vm295, %v289, %v178
    %v297 = vsel %vm295, %v283, %v179
    %s298 = scalar_lea.vmem %s0, 16
    %v299 = vld [vmem:[%s298] sm:$0xff]
    %300 = vset.pattern.permute.xlu0 0
    %301 = vperm.xlu0 %300, %v299
    %v302 = vpop.permute.xlu0 %301
    %vm303 = vcmp.eq.s32.totalorder %v302, %v58
    %v304 = vsel %vm303, 1, 0
    %v305 = vcvt.s32.f32 %v304
    %307 = vrot.lane.b32.xlu0 %v296, 96
    %v308 = vpop.permute.xlu0 %307
    %v310 = vsel %vm66, %v305, %v308
    %v312 = vsel %vm74, %v310, 0
    %314 = vmatprep.subr.mxu0 0.0
    %315 = vmatpush1.msra.mxu0 0.0
    %316 = vmatprep.subr.mxu0 0.0
    %317 = vmatpush1.msra.mxu0 0.0
    %318 = vmatprep.subr.mxu0 0.0
    %319 = vmatpush1.msra.mxu0 0.0
    %320 = vmatprep.subr.mxu0 0.0
    %321 = vmatpush1.msra.mxu0 0.0
    %322 = vmatprep.subr.mxu0 0.0
    %323 = vmatpush1.msra.mxu0 %v49
    %324 = vmatprep.subr.mxu0 0.0
    %325 = vmatpush1.msra.mxu0 %v48
    %326 = vmatprep.subr.mxu0 0.0
    %327 = vmatpush1.msra.mxu0 %v47
    %328 = vmatprep.subr.mxu0 0.0
    %329 = vmatpush1.msra.mxu0 %v46
    %330 = vmatprep.subr.mxu0 0.0
    %331 = vmatpush1.msra.mxu0 %v45
    %332 = vmatprep.subr.mxu0 0.0
    %333 = vmatpush1.msra.mxu0 %v44
    %334 = vmatprep.subr.mxu0 0.0
    %335 = vmatpush1.msra.mxu0 %v43
    %336 = vmatprep.subr.mxu0 0.0
    %337 = vmatpush1.msra.mxu0 %v42
    %338 = vmatprep.subr.mxu0 0.0
    %339 = vmatpush1.msra.mxu0 %v41
    %340 = vmatprep.subr.mxu0 0.0
    %341 = vmatpush1.msra.mxu0 %v40
    %342 = vmatprep.subr.mxu0 0.0
    %343 = vmatpush1.msra.mxu0 %v39
    %344 = vmatprep.subr.mxu0 0.0
    %345 = vmatpush1.msra.mxu0 %v38
    %346 = vmatprep.subr.mxu0 0.0
    %347 = vmatpush2.msra.mxu0 0.0
    %348 = vmatprep.subr.mxu0 0.0
    %349 = vmatpush2.msra.mxu0 0.0
    %350 = vmatprep.subr.mxu0 0.0
    %351 = vmatpush2.msra.mxu0 0.0
    %352 = vmatprep.subr.mxu0 0.0
    %353 = vmatpush2.msra.mxu0 0.0
    %354 = vmatprep.subr.mxu0 0.0
    %355 = vmatpush2.msra.mxu0 0.0
    %356 = vmatprep.subr.mxu0 0.0
    %357 = vmatpush2.msra.mxu0 0.0
    %358 = vmatprep.subr.mxu0 0.0
    %359 = vmatpush2.msra.mxu0 0.0
    %360 = vmatprep.subr.mxu0 0.0
    %361 = vmatpush2.msra.mxu0 0.0
    %362 = vmatprep.subr.mxu0 0.0
    %363 = vmatpush2.msra.mxu0 0.0
    %364 = vmatprep.subr.mxu0 0.0
    %365 = vmatpush2.msra.mxu0 0.0
    %366 = vmatprep.subr.mxu0 0.0
    %367 = vmatpush2.msra.mxu0 0.0
    %368 = vmatprep.subr.mxu0 0.0
    %369 = vmatpush2.msra.mxu0 0.0
    %370 = vmatprep.subr.mxu0 0.0
    %371 = vmatpush2.msra.mxu0 0.0
    %372 = vmatprep.subr.mxu0 0.0
    %373 = vmatpush2.msra.mxu0 0.0
    %374 = vmatprep.subr.mxu0 0.0
    %375 = vmatpush2.msra.mxu0 0.0
    %376 = vmatprep.subr.mxu0 0.0
    %377 = vmatpush2.msra.mxu0 0.0
    %378 = vmatprep.mubr.f32.mxu0 0.0
    %379 = vmatmul.mubr.f32.gmra.mxu0 %v312
    %v380 = vpop.f32.mrf.mxu0
    %v381 = vadd.f32 %v72, %v380
    %v382 = vpop.f32.mrf.mxu0
    %383 = vdwg.mxu0
    %v384 = vxor.u32 %v381, 2147483648
    %v385 = vmul.f32 %v384, 1.442695
    %v386 = vpow.pop %v385
    %v387 = vadd.f32 %v386, 1.0
    %v388 = vrcp.pop %v387
    %v389 = vmul.f32 1.0, %v388
    %v390 = vtanh.pop %v381
    %v391 = vmul.f32 %v389, %v297
    %393 = vrot.lane.b32.xlu0 %v390, 64
    %v394 = vpop.permute.xlu0 %393
    %v396 = vmul.f32 %v389, %v394
    %398 = vrot.lane.b32.xlu0 %v396, 32
    %v399 = vpop.permute.xlu0 %398
    %v401 = vadd.f32 %v391, %v399
    %v402 = vtanh.pop %v401
    %404 = vrot.lane.b32.xlu0 %v402, 64
    %v405 = vpop.permute.xlu0 %404
    %v407 = vmul.f32 %v389, %v405
    %vm408 = vcmp.gt.s32.totalorder %v56, 2
    %v409 = vsel %vm408, 1, 0
    %410 = vset.pattern.permute.xlu0 0
    %411 = vperm.xlu0 %410, %v409
    %v412 = vpop.permute.xlu0 %411
    %vm413 = vcmp.eq.s32.totalorder %v412, 1
    %v414 = vsel %vm413, %v407, %v296
    %v415 = vsel %vm413, %v401, %v297
    %s416 = scalar_lea.vmem %s0, 24
    %v417 = vld [vmem:[%s416] sm:$0xff]
    %418 = vset.pattern.permute.xlu0 0
    %419 = vperm.xlu0 %418, %v417
    %v420 = vpop.permute.xlu0 %419
    %vm421 = vcmp.eq.s32.totalorder %v420, %v58
    %v422 = vsel %vm421, 1, 0
    %v423 = vcvt.s32.f32 %v422
    %425 = vrot.lane.b32.xlu0 %v414, 96
    %v426 = vpop.permute.xlu0 %425
    %v428 = vsel %vm66, %v423, %v426
    %v430 = vsel %vm74, %v428, 0
    %432 = vmatprep.subr.mxu0 0.0
    %433 = vmatpush1.msra.mxu0 0.0
    %434 = vmatprep.subr.mxu0 0.0
    %435 = vmatpush1.msra.mxu0 0.0
    %436 = vmatprep.subr.mxu0 0.0
    %437 = vmatpush1.msra.mxu0 0.0
    %438 = vmatprep.subr.mxu0 0.0
    %439 = vmatpush1.msra.mxu0 0.0
    %440 = vmatprep.subr.mxu0 0.0
    %441 = vmatpush1.msra.mxu0 %v49
    %442 = vmatprep.subr.mxu0 0.0
    %443 = vmatpush1.msra.mxu0 %v48
    %444 = vmatprep.subr.mxu0 0.0
    %445 = vmatpush1.msra.mxu0 %v47
    %446 = vmatprep.subr.mxu0 0.0
    %447 = vmatpush1.msra.mxu0 %v46
    %448 = vmatprep.subr.mxu0 0.0
    %449 = vmatpush1.msra.mxu0 %v45
    %450 = vmatprep.subr.mxu0 0.0
    %451 = vmatpush1.msra.mxu0 %v44
    %452 = vmatprep.subr.mxu0 0.0
    %453 = vmatpush1.msra.mxu0 %v43
    %454 = vmatprep.subr.mxu0 0.0
    %455 = vmatpush1.msra.mxu0 %v42
    %456 = vmatprep.subr.mxu0 0.0
    %457 = vmatpush1.msra.mxu0 %v41
    %458 = vmatprep.subr.mxu0 0.0
    %459 = vmatpush1.msra.mxu0 %v40
    %460 = vmatprep.subr.mxu0 0.0
    %461 = vmatpush1.msra.mxu0 %v39
    %462 = vmatprep.subr.mxu0 0.0
    %463 = vmatpush1.msra.mxu0 %v38
    %464 = vmatprep.subr.mxu0 0.0
    %465 = vmatpush2.msra.mxu0 0.0
    %466 = vmatprep.subr.mxu0 0.0
    %467 = vmatpush2.msra.mxu0 0.0
    %468 = vmatprep.subr.mxu0 0.0
    %469 = vmatpush2.msra.mxu0 0.0
    %470 = vmatprep.subr.mxu0 0.0
    %471 = vmatpush2.msra.mxu0 0.0
    %472 = vmatprep.subr.mxu0 0.0
    %473 = vmatpush2.msra.mxu0 0.0
    %474 = vmatprep.subr.mxu0 0.0
    %475 = vmatpush2.msra.mxu0 0.0
    %476 = vmatprep.subr.mxu0 0.0
    %477 = vmatpush2.msra.mxu0 0.0
    %478 = vmatprep.subr.mxu0 0.0
    %479 = vmatpush2.msra.mxu0 0.0
    %480 = vmatprep.subr.mxu0 0.0
    %481 = vmatpush2.msra.mxu0 0.0
    %482 = vmatprep.subr.mxu0 0.0
    %483 = vmatpush2.msra.mxu0 0.0
    %484 = vmatprep.subr.mxu0 0.0
    %485 = vmatpush2.msra.mxu0 0.0
    %486 = vmatprep.subr.mxu0 0.0
    %487 = vmatpush2.msra.mxu0 0.0
    %488 = vmatprep.subr.mxu0 0.0
    %489 = vmatpush2.msra.mxu0 0.0
    %490 = vmatprep.subr.mxu0 0.0
    %491 = vmatpush2.msra.mxu0 0.0
    %492 = vmatprep.subr.mxu0 0.0
    %493 = vmatpush2.msra.mxu0 0.0
    %494 = vmatprep.subr.mxu0 0.0
    %495 = vmatpush2.msra.mxu0 0.0
    %496 = vmatprep.mubr.f32.mxu0 0.0
    %497 = vmatmul.mubr.f32.gmra.mxu0 %v430
    %v498 = vpop.f32.mrf.mxu0
    %v499 = vadd.f32 %v72, %v498
    %v500 = vpop.f32.mrf.mxu0
    %501 = vdwg.mxu0
    %v502 = vxor.u32 %v499, 2147483648
    %v503 = vmul.f32 %v502, 1.442695
    %v504 = vpow.pop %v503
    %v505 = vadd.f32 %v504, 1.0
    %v506 = vrcp.pop %v505
    %v507 = vmul.f32 1.0, %v506
    %v508 = vtanh.pop %v499
    %v509 = vmul.f32 %v507, %v415
    %511 = vrot.lane.b32.xlu0 %v508, 64
    %v512 = vpop.permute.xlu0 %511
    %v514 = vmul.f32 %v507, %v512
    %516 = vrot.lane.b32.xlu0 %v514, 32
    %v517 = vpop.permute.xlu0 %516
    %v519 = vadd.f32 %v509, %v517
    %v520 = vtanh.pop %v519
    %522 = vrot.lane.b32.xlu0 %v520, 64
    %v523 = vpop.permute.xlu0 %522
    %v525 = vmul.f32 %v507, %v523
    %vm526 = vcmp.gt.s32.totalorder %v56, 3
    %v527 = vsel %vm526, 1, 0
    %528 = vset.pattern.permute.xlu0 0
    %529 = vperm.xlu0 %528, %v527
    %v530 = vpop.permute.xlu0 %529
    %vm531 = vcmp.eq.s32.totalorder %v530, 1
    %v532 = vsel %vm531, %v525, %v414
    %v533 = vsel %vm531, %v519, %v415
    %s534 = scalar_lea.vmem %s0, 32
    %v535 = vld [vmem:[%s534] sm:$0xff]
    %536 = vset.pattern.permute.xlu0 0
    %537 = vperm.xlu0 %536, %v535
    %v538 = vpop.permute.xlu0 %537
    %vm539 = vcmp.eq.s32.totalorder %v538, %v58
    %v540 = vsel %vm539, 1, 0
    %v541 = vcvt.s32.f32 %v540
    %543 = vrot.lane.b32.xlu0 %v532, 96
    %v544 = vpop.permute.xlu0 %543
    %v546 = vsel %vm66, %v541, %v544
    %v548 = vsel %vm74, %v546, 0
    %550 = vmatprep.subr.mxu0 0.0
    %551 = vmatpush1.msra.mxu0 0.0
    %552 = vmatprep.subr.mxu0 0.0
    %553 = vmatpush1.msra.mxu0 0.0
    %554 = vmatprep.subr.mxu0 0.0
    %555 = vmatpush1.msra.mxu0 0.0
    %556 = vmatprep.subr.mxu0 0.0
    %557 = vmatpush1.msra.mxu0 0.0
    %558 = vmatprep.subr.mxu0 0.0
    %559 = vmatpush1.msra.mxu0 %v49
    %560 = vmatprep.subr.mxu0 0.0
    %561 = vmatpush1.msra.mxu0 %v48
    %562 = vmatprep.subr.mxu0 0.0
    %563 = vmatpush1.msra.mxu0 %v47
    %564 = vmatprep.subr.mxu0 0.0
    %565 = vmatpush1.msra.mxu0 %v46
    %566 = vmatprep.subr.mxu0 0.0
    %567 = vmatpush1.msra.mxu0 %v45
    %568 = vmatprep.subr.mxu0 0.0
    %569 = vmatpush1.msra.mxu0 %v44
    %570 = vmatprep.subr.mxu0 0.0
    %571 = vmatpush1.msra.mxu0 %v43
    %572 = vmatprep.subr.mxu0 0.0
    %573 = vmatpush1.msra.mxu0 %v42
    %574 = vmatprep.subr.mxu0 0.0
    %575 = vmatpush1.msra.mxu0 %v41
    %576 = vmatprep.subr.mxu0 0.0
    %577 = vmatpush1.msra.mxu0 %v40
    %578 = vmatprep.subr.mxu0 0.0
    %579 = vmatpush1.msra.mxu0 %v39
    %580 = vmatprep.subr.mxu0 0.0
    %581 = vmatpush1.msra.mxu0 %v38
    %582 = vmatprep.subr.mxu0 0.0
    %583 = vmatpush2.msra.mxu0 0.0
    %584 = vmatprep.subr.mxu0 0.0
    %585 = vmatpush2.msra.mxu0 0.0
    %586 = vmatprep.subr.mxu0 0.0
    %587 = vmatpush2.msra.mxu0 0.0
    %588 = vmatprep.subr.mxu0 0.0
    %589 = vmatpush2.msra.mxu0 0.0
    %590 = vmatprep.subr.mxu0 0.0
    %591 = vmatpush2.msra.mxu0 0.0
    %592 = vmatprep.subr.mxu0 0.0
    %593 = vmatpush2.msra.mxu0 0.0
    %594 = vmatprep.subr.mxu0 0.0
    %595 = vmatpush2.msra.mxu0 0.0
    %596 = vmatprep.subr.mxu0 0.0
    %597 = vmatpush2.msra.mxu0 0.0
    %598 = vmatprep.subr.mxu0 0.0
    %599 = vmatpush2.msra.mxu0 0.0
    %600 = vmatprep.subr.mxu0 0.0
    %601 = vmatpush2.msra.mxu0 0.0
    %602 = vmatprep.subr.mxu0 0.0
    %603 = vmatpush2.msra.mxu0 0.0
    %604 = vmatprep.subr.mxu0 0.0
    %605 = vmatpush2.msra.mxu0 0.0
    %606 = vmatprep.subr.mxu0 0.0
    %607 = vmatpush2.msra.mxu0 0.0
    %608 = vmatprep.subr.mxu0 0.0
    %609 = vmatpush2.msra.mxu0 0.0
    %610 = vmatprep.subr.mxu0 0.0
    %611 = vmatpush2.msra.mxu0 0.0
    %612 = vmatprep.subr.mxu0 0.0
    %613 = vmatpush2.msra.mxu0 0.0
    %614 = vmatprep.mubr.f32.mxu0 0.0
    %615 = vmatmul.mubr.f32.gmra.mxu0 %v548
    %v616 = vpop.f32.mrf.mxu0
    %v617 = vadd.f32 %v72, %v616
    %v618 = vpop.f32.mrf.mxu0
    %619 = vdwg.mxu0
    %v620 = vxor.u32 %v617, 2147483648
    %v621 = vmul.f32 %v620, 1.442695
    %v622 = vpow.pop %v621
    %v623 = vadd.f32 %v622, 1.0
    %v624 = vrcp.pop %v623
    %v625 = vmul.f32 1.0, %v624
    %v626 = vtanh.pop %v617
    %v627 = vmul.f32 %v625, %v533
    %629 = vrot.lane.b32.xlu0 %v626, 64
    %v630 = vpop.permute.xlu0 %629
    %v632 = vmul.f32 %v625, %v630
    %634 = vrot.lane.b32.xlu0 %v632, 32
    %v635 = vpop.permute.xlu0 %634
    %v637 = vadd.f32 %v627, %v635
    %v638 = vtanh.pop %v637
    %640 = vrot.lane.b32.xlu0 %v638, 64
    %v641 = vpop.permute.xlu0 %640
    %v643 = vmul.f32 %v625, %v641
    %vm644 = vcmp.gt.s32.totalorder %v56, 4
    %v645 = vsel %vm644, 1, 0
    %646 = vset.pattern.permute.xlu0 0
    %647 = vperm.xlu0 %646, %v645
    %v648 = vpop.permute.xlu0 %647
    %vm649 = vcmp.eq.s32.totalorder %v648, 1
    %v650 = vsel %vm649, %v643, %v532
    %v651 = vsel %vm649, %v637, %v533
    %s652 = scalar_lea.vmem %s0, 40
    %v653 = vld [vmem:[%s652] sm:$0xff]
    %654 = vset.pattern.permute.xlu0 0
    %655 = vperm.xlu0 %654, %v653
    %v656 = vpop.permute.xlu0 %655
    %vm657 = vcmp.eq.s32.totalorder %v656, %v58
    %v658 = vsel %vm657, 1, 0
    %v659 = vcvt.s32.f32 %v658
    %661 = vrot.lane.b32.xlu0 %v650, 96
    %v662 = vpop.permute.xlu0 %661
    %v664 = vsel %vm66, %v659, %v662
    %v666 = vsel %vm74, %v664, 0
    %668 = vmatprep.subr.mxu0 0.0
    %669 = vmatpush1.msra.mxu0 0.0
    %670 = vmatprep.subr.mxu0 0.0
    %671 = vmatpush1.msra.mxu0 0.0
    %672 = vmatprep.subr.mxu0 0.0
    %673 = vmatpush1.msra.mxu0 0.0
    %674 = vmatprep.subr.mxu0 0.0
    %675 = vmatpush1.msra.mxu0 0.0
    %676 = vmatprep.subr.mxu0 0.0
    %677 = vmatpush1.msra.mxu0 %v49
    %678 = vmatprep.subr.mxu0 0.0
    %679 = vmatpush1.msra.mxu0 %v48
    %680 = vmatprep.subr.mxu0 0.0
    %681 = vmatpush1.msra.mxu0 %v47
    %682 = vmatprep.subr.mxu0 0.0
    %683 = vmatpush1.msra.mxu0 %v46
    %684 = vmatprep.subr.mxu0 0.0
    %685 = vmatpush1.msra.mxu0 %v45
    %686 = vmatprep.subr.mxu0 0.0
    %687 = vmatpush1.msra.mxu0 %v44
    %688 = vmatprep.subr.mxu0 0.0
    %689 = vmatpush1.msra.mxu0 %v43
    %690 = vmatprep.subr.mxu0 0.0
    %691 = vmatpush1.msra.mxu0 %v42
    %692 = vmatprep.subr.mxu0 0.0
    %693 = vmatpush1.msra.mxu0 %v41
    %694 = vmatprep.subr.mxu0 0.0
    %695 = vmatpush1.msra.mxu0 %v40
    %696 = vmatprep.subr.mxu0 0.0
    %697 = vmatpush1.msra.mxu0 %v39
    %698 = vmatprep.subr.mxu0 0.0
    %699 = vmatpush1.msra.mxu0 %v38
    %700 = vmatprep.subr.mxu0 0.0
    %701 = vmatpush2.msra.mxu0 0.0
    %702 = vmatprep.subr.mxu0 0.0
    %703 = vmatpush2.msra.mxu0 0.0
    %704 = vmatprep.subr.mxu0 0.0
    %705 = vmatpush2.msra.mxu0 0.0
    %706 = vmatprep.subr.mxu0 0.0
    %707 = vmatpush2.msra.mxu0 0.0
    %708 = vmatprep.subr.mxu0 0.0
    %709 = vmatpush2.msra.mxu0 0.0
    %710 = vmatprep.subr.mxu0 0.0
    %711 = vmatpush2.msra.mxu0 0.0
    %712 = vmatprep.subr.mxu0 0.0
    %713 = vmatpush2.msra.mxu0 0.0
    %714 = vmatprep.subr.mxu0 0.0
    %715 = vmatpush2.msra.mxu0 0.0
    %716 = vmatprep.subr.mxu0 0.0
    %717 = vmatpush2.msra.mxu0 0.0
    %718 = vmatprep.subr.mxu0 0.0
    %719 = vmatpush2.msra.mxu0 0.0
    %720 = vmatprep.subr.mxu0 0.0
    %721 = vmatpush2.msra.mxu0 0.0
    %722 = vmatprep.subr.mxu0 0.0
    %723 = vmatpush2.msra.mxu0 0.0
    %724 = vmatprep.subr.mxu0 0.0
    %725 = vmatpush2.msra.mxu0 0.0
    %726 = vmatprep.subr.mxu0 0.0
    %727 = vmatpush2.msra.mxu0 0.0
    %728 = vmatprep.subr.mxu0 0.0
    %729 = vmatpush2.msra.mxu0 0.0
    %730 = vmatprep.subr.mxu0 0.0
    %731 = vmatpush2.msra.mxu0 0.0
    %732 = vmatprep.mubr.f32.mxu0 0.0
    %733 = vmatmul.mubr.f32.gmra.mxu0 %v666
    %v734 = vpop.f32.mrf.mxu0
    %v735 = vadd.f32 %v72, %v734
    %v736 = vpop.f32.mrf.mxu0
    %737 = vdwg.mxu0
    %v738 = vxor.u32 %v735, 2147483648
    %v739 = vmul.f32 %v738, 1.442695
    %v740 = vpow.pop %v739
    %v741 = vadd.f32 %v740, 1.0
    %v742 = vrcp.pop %v741
    %v743 = vmul.f32 1.0, %v742
    %v744 = vtanh.pop %v735
    %v745 = vmul.f32 %v743, %v651
    %747 = vrot.lane.b32.xlu0 %v744, 64
    %v748 = vpop.permute.xlu0 %747
    %v750 = vmul.f32 %v743, %v748
    %752 = vrot.lane.b32.xlu0 %v750, 32
    %v753 = vpop.permute.xlu0 %752
    %v755 = vadd.f32 %v745, %v753
    %v756 = vtanh.pop %v755
    %758 = vrot.lane.b32.xlu0 %v756, 64
    %v759 = vpop.permute.xlu0 %758
    %v761 = vmul.f32 %v743, %v759
    %vm762 = vcmp.gt.s32.totalorder %v56, 5
    %v763 = vsel %vm762, 1, 0
    %764 = vset.pattern.permute.xlu0 0
    %765 = vperm.xlu0 %764, %v763
    %v766 = vpop.permute.xlu0 %765
    %vm767 = vcmp.eq.s32.totalorder %v766, 1
    %v768 = vsel %vm767, %v761, %v650
    %v769 = vsel %vm767, %v755, %v651
    %s770 = scalar_lea.vmem %s0, 48
    %v771 = vld [vmem:[%s770] sm:$0xff]
    %772 = vset.pattern.permute.xlu0 0
    %773 = vperm.xlu0 %772, %v771
    %v774 = vpop.permute.xlu0 %773
    %vm775 = vcmp.eq.s32.totalorder %v774, %v58
    %v776 = vsel %vm775, 1, 0
    %v777 = vcvt.s32.f32 %v776
    %779 = vrot.lane.b32.xlu0 %v768, 96
    %v780 = vpop.permute.xlu0 %779
    %v782 = vsel %vm66, %v777, %v780
    %v784 = vsel %vm74, %v782, 0
    %786 = vmatprep.subr.mxu0 0.0
    %787 = vmatpush1.msra.mxu0 0.0
    %788 = vmatprep.subr.mxu0 0.0
    %789 = vmatpush1.msra.mxu0 0.0
    %790 = vmatprep.subr.mxu0 0.0
    %791 = vmatpush1.msra.mxu0 0.0
    %792 = vmatprep.subr.mxu0 0.0
    %793 = vmatpush1.msra.mxu0 0.0
    %794 = vmatprep.subr.mxu0 0.0
    %795 = vmatpush1.msra.mxu0 %v49
    %796 = vmatprep.subr.mxu0 0.0
    %797 = vmatpush1.msra.mxu0 %v48
    %798 = vmatprep.subr.mxu0 0.0
    %799 = vmatpush1.msra.mxu0 %v47
    %800 = vmatprep.subr.mxu0 0.0
    %801 = vmatpush1.msra.mxu0 %v46
    %802 = vmatprep.subr.mxu0 0.0
    %803 = vmatpush1.msra.mxu0 %v45
    %804 = vmatprep.subr.mxu0 0.0
    %805 = vmatpush1.msra.mxu0 %v44
    %806 = vmatprep.subr.mxu0 0.0
    %807 = vmatpush1.msra.mxu0 %v43
    %808 = vmatprep.subr.mxu0 0.0
    %809 = vmatpush1.msra.mxu0 %v42
    %810 = vmatprep.subr.mxu0 0.0
    %811 = vmatpush1.msra.mxu0 %v41
    %812 = vmatprep.subr.mxu0 0.0
    %813 = vmatpush1.msra.mxu0 %v40
    %814 = vmatprep.subr.mxu0 0.0
    %815 = vmatpush1.msra.mxu0 %v39
    %816 = vmatprep.subr.mxu0 0.0
    %817 = vmatpush1.msra.mxu0 %v38
    %818 = vmatprep.subr.mxu0 0.0
    %819 = vmatpush2.msra.mxu0 0.0
    %820 = vmatprep.subr.mxu0 0.0
    %821 = vmatpush2.msra.mxu0 0.0
    %822 = vmatprep.subr.mxu0 0.0
    %823 = vmatpush2.msra.mxu0 0.0
    %824 = vmatprep.subr.mxu0 0.0
    %825 = vmatpush2.msra.mxu0 0.0
    %826 = vmatprep.subr.mxu0 0.0
    %827 = vmatpush2.msra.mxu0 0.0
    %828 = vmatprep.subr.mxu0 0.0
    %829 = vmatpush2.msra.mxu0 0.0
    %830 = vmatprep.subr.mxu0 0.0
    %831 = vmatpush2.msra.mxu0 0.0
    %832 = vmatprep.subr.mxu0 0.0
    %833 = vmatpush2.msra.mxu0 0.0
    %834 = vmatprep.subr.mxu0 0.0
    %835 = vmatpush2.msra.mxu0 0.0
    %836 = vmatprep.subr.mxu0 0.0
    %837 = vmatpush2.msra.mxu0 0.0
    %838 = vmatprep.subr.mxu0 0.0
    %839 = vmatpush2.msra.mxu0 0.0
    %840 = vmatprep.subr.mxu0 0.0
    %841 = vmatpush2.msra.mxu0 0.0
    %842 = vmatprep.subr.mxu0 0.0
    %843 = vmatpush2.msra.mxu0 0.0
    %844 = vmatprep.subr.mxu0 0.0
    %845 = vmatpush2.msra.mxu0 0.0
    %846 = vmatprep.subr.mxu0 0.0
    %847 = vmatpush2.msra.mxu0 0.0
    %848 = vmatprep.subr.mxu0 0.0
    %849 = vmatpush2.msra.mxu0 0.0
    %850 = vmatprep.mubr.f32.mxu0 0.0
    %851 = vmatmul.mubr.f32.gmra.mxu0 %v784
    %v852 = vpop.f32.mrf.mxu0
    %v853 = vadd.f32 %v72, %v852
    %v854 = vpop.f32.mrf.mxu0
    %855 = vdwg.mxu0
    %v856 = vxor.u32 %v853, 2147483648
    %v857 = vmul.f32 %v856, 1.442695
    %v858 = vpow.pop %v857
    %v859 = vadd.f32 %v858, 1.0
    %v860 = vrcp.pop %v859
    %v861 = vmul.f32 1.0, %v860
    %v862 = vtanh.pop %v853
    %v863 = vmul.f32 %v861, %v769
    %865 = vrot.lane.b32.xlu0 %v862, 64
    %v866 = vpop.permute.xlu0 %865
    %v868 = vmul.f32 %v861, %v866
    %870 = vrot.lane.b32.xlu0 %v868, 32
    %v871 = vpop.permute.xlu0 %870
    %v873 = vadd.f32 %v863, %v871
    %v874 = vtanh.pop %v873
    %876 = vrot.lane.b32.xlu0 %v874, 64
    %v877 = vpop.permute.xlu0 %876
    %v879 = vmul.f32 %v861, %v877
    %vm880 = vcmp.gt.s32.totalorder %v56, 6
    %v881 = vsel %vm880, 1, 0
    %882 = vset.pattern.permute.xlu0 0
    %883 = vperm.xlu0 %882, %v881
    %v884 = vpop.permute.xlu0 %883
    %vm885 = vcmp.eq.s32.totalorder %v884, 1
    %v886 = vsel %vm885, %v879, %v768
    %v887 = vsel %vm885, %v873, %v769
    %s888 = scalar_lea.vmem %s0, 56
    %v889 = vld [vmem:[%s888] sm:$0xff]
    %890 = vset.pattern.permute.xlu0 0
    %891 = vperm.xlu0 %890, %v889
    %v892 = vpop.permute.xlu0 %891
    %vm893 = vcmp.eq.s32.totalorder %v892, %v58
    %v894 = vsel %vm893, 1, 0
    %v895 = vcvt.s32.f32 %v894
    %897 = vrot.lane.b32.xlu0 %v886, 96
    %v898 = vpop.permute.xlu0 %897
    %v900 = vsel %vm66, %v895, %v898
    %v902 = vsel %vm74, %v900, 0
    %904 = vmatprep.subr.mxu0 0.0
    %905 = vmatpush1.msra.mxu0 0.0
    %906 = vmatprep.subr.mxu0 0.0
    %907 = vmatpush1.msra.mxu0 0.0
    %908 = vmatprep.subr.mxu0 0.0
    %909 = vmatpush1.msra.mxu0 0.0
    %910 = vmatprep.subr.mxu0 0.0
    %911 = vmatpush1.msra.mxu0 0.0
    %912 = vmatprep.subr.mxu0 0.0
    %913 = vmatpush1.msra.mxu0 %v49
    %914 = vmatprep.subr.mxu0 0.0
    %915 = vmatpush1.msra.mxu0 %v48
    %916 = vmatprep.subr.mxu0 0.0
    %917 = vmatpush1.msra.mxu0 %v47
    %918 = vmatprep.subr.mxu0 0.0
    %919 = vmatpush1.msra.mxu0 %v46
    %920 = vmatprep.subr.mxu0 0.0
    %921 = vmatpush1.msra.mxu0 %v45
    %922 = vmatprep.subr.mxu0 0.0
    %923 = vmatpush1.msra.mxu0 %v44
    %924 = vmatprep.subr.mxu0 0.0
    %925 = vmatpush1.msra.mxu0 %v43
    %926 = vmatprep.subr.mxu0 0.0
    %927 = vmatpush1.msra.mxu0 %v42
    %928 = vmatprep.subr.mxu0 0.0
    %929 = vmatpush1.msra.mxu0 %v41
    %930 = vmatprep.subr.mxu0 0.0
    %931 = vmatpush1.msra.mxu0 %v40
    %932 = vmatprep.subr.mxu0 0.0
    %933 = vmatpush1.msra.mxu0 %v39
    %934 = vmatprep.subr.mxu0 0.0
    %935 = vmatpush1.msra.mxu0 %v38
    %936 = vmatprep.subr.mxu0 0.0
    %937 = vmatpush2.msra.mxu0 0.0
    %938 = vmatprep.subr.mxu0 0.0
    %939 = vmatpush2.msra.mxu0 0.0
    %940 = vmatprep.subr.mxu0 0.0
    %941 = vmatpush2.msra.mxu0 0.0
    %942 = vmatprep.subr.mxu0 0.0
    %943 = vmatpush2.msra.mxu0 0.0
    %944 = vmatprep.subr.mxu0 0.0
    %945 = vmatpush2.msra.mxu0 0.0
    %946 = vmatprep.subr.mxu0 0.0
    %947 = vmatpush2.msra.mxu0 0.0
    %948 = vmatprep.subr.mxu0 0.0
    %949 = vmatpush2.msra.mxu0 0.0
    %950 = vmatprep.subr.mxu0 0.0
    %951 = vmatpush2.msra.mxu0 0.0
    %952 = vmatprep.subr.mxu0 0.0
    %953 = vmatpush2.msra.mxu0 0.0
    %954 = vmatprep.subr.mxu0 0.0
    %955 = vmatpush2.msra.mxu0 0.0
    %956 = vmatprep.subr.mxu0 0.0
    %957 = vmatpush2.msra.mxu0 0.0
    %958 = vmatprep.subr.mxu0 0.0
    %959 = vmatpush2.msra.mxu0 0.0
    %960 = vmatprep.subr.mxu0 0.0
    %961 = vmatpush2.msra.mxu0 0.0
    %962 = vmatprep.subr.mxu0 0.0
    %963 = vmatpush2.msra.mxu0 0.0
    %964 = vmatprep.subr.mxu0 0.0
    %965 = vmatpush2.msra.mxu0 0.0
    %966 = vmatprep.subr.mxu0 0.0
    %967 = vmatpush2.msra.mxu0 0.0
    %968 = vmatprep.mubr.f32.mxu0 0.0
    %969 = vmatmul.mubr.f32.gmra.mxu0 %v902
    %v970 = vpop.f32.mrf.mxu0
    %v971 = vadd.f32 %v72, %v970
    %v972 = vpop.f32.mrf.mxu0
    %973 = vdwg.mxu0
    %v974 = vxor.u32 %v971, 2147483648
    %v975 = vmul.f32 %v974, 1.442695
    %v976 = vpow.pop %v975
    %v977 = vadd.f32 %v976, 1.0
    %v978 = vrcp.pop %v977
    %v979 = vmul.f32 1.0, %v978
    %v980 = vtanh.pop %v971
    %v981 = vmul.f32 %v979, %v887
    %983 = vrot.lane.b32.xlu0 %v980, 64
    %v984 = vpop.permute.xlu0 %983
    %v986 = vmul.f32 %v979, %v984
    %988 = vrot.lane.b32.xlu0 %v986, 32
    %v989 = vpop.permute.xlu0 %988
    %v991 = vadd.f32 %v981, %v989
    %v992 = vtanh.pop %v991
    %994 = vrot.lane.b32.xlu0 %v992, 64
    %v995 = vpop.permute.xlu0 %994
    %v997 = vmul.f32 %v979, %v995
    %vm998 = vcmp.gt.s32.totalorder %v56, 7
    %v999 = vsel %vm998, 1, 0
    %1000 = vset.pattern.permute.xlu0 0
    %1001 = vperm.xlu0 %1000, %v999
    %v1002 = vpop.permute.xlu0 %1001
    %vm1003 = vcmp.eq.s32.totalorder %v1002, 1
    %v1004 = vsel %vm1003, %v997, %v886
    %v1006 = vlaneseq
    %v1007 = vshrl.u32 %v1006, 7
    %v1008 = vsub.s32 0, %v1007
    %v1009 = vrot.slane %v55, %v1008
    %1012 = vrot.lane.b32.xlu0 %v1004, 32
    %v1013 = vpop.permute.xlu0 %1012
    %vm1014 = vcmask 261120
    %v1015 = vsel %vm1014, %v1013, 0
    %1017 = vmatprep.subr.mxu0 0.0
    %1018 = vmatpush1.msra.mxu0 0.0
    %1019 = vmatprep.subr.mxu0 0.0
    %1020 = vmatpush1.msra.mxu0 0.0
    %1021 = vmatprep.subr.mxu0 0.0
    %1022 = vmatpush1.msra.mxu0 0.0
    %1023 = vmatprep.subr.mxu0 0.0
    %1024 = vmatpush1.msra.mxu0 0.0
    %1025 = vmatprep.subr.mxu0 0.0
    %1026 = vmatpush1.msra.mxu0 0.0
    %1027 = vmatprep.subr.mxu0 0.0
    %1028 = vmatpush1.msra.mxu0 0.0
    %1029 = vmatprep.subr.mxu0 0.0
    %1030 = vmatpush1.msra.mxu0 0.0
    %1031 = vmatprep.subr.mxu0 0.0
    %1032 = vmatpush1.msra.mxu0 0.0
    %1033 = vmatprep.subr.mxu0 0.0
    %1034 = vmatpush1.msra.mxu0 0.0
    %1035 = vmatprep.subr.mxu0 0.0
    %1036 = vmatpush1.msra.mxu0 0.0
    %1037 = vmatprep.subr.mxu0 0.0
    %1038 = vmatpush1.msra.mxu0 0.0
    %1039 = vmatprep.subr.mxu0 0.0
    %1040 = vmatpush1.msra.mxu0 0.0
    %1041 = vmatprep.subr.mxu0 0.0
    %1042 = vmatpush1.msra.mxu0 %v54
    %1043 = vmatprep.subr.mxu0 0.0
    %1044 = vmatpush1.msra.mxu0 %v53
    %1045 = vmatprep.subr.mxu0 0.0
    %1046 = vmatpush1.msra.mxu0 %v52
    %1047 = vmatprep.subr.mxu0 0.0
    %1048 = vmatpush1.msra.mxu0 %v51
    %1049 = vmatprep.subr.mxu0 0.0
    %1050 = vmatpush2.msra.mxu0 0.0
    %1051 = vmatprep.subr.mxu0 0.0
    %1052 = vmatpush2.msra.mxu0 0.0
    %1053 = vmatprep.subr.mxu0 0.0
    %1054 = vmatpush2.msra.mxu0 0.0
    %1055 = vmatprep.subr.mxu0 0.0
    %1056 = vmatpush2.msra.mxu0 0.0
    %1057 = vmatprep.subr.mxu0 0.0
    %1058 = vmatpush2.msra.mxu0 0.0
    %1059 = vmatprep.subr.mxu0 0.0
    %1060 = vmatpush2.msra.mxu0 0.0
    %1061 = vmatprep.subr.mxu0 0.0
    %1062 = vmatpush2.msra.mxu0 0.0
    %1063 = vmatprep.subr.mxu0 0.0
    %1064 = vmatpush2.msra.mxu0 0.0
    %1065 = vmatprep.subr.mxu0 0.0
    %1066 = vmatpush2.msra.mxu0 0.0
    %1067 = vmatprep.subr.mxu0 0.0
    %1068 = vmatpush2.msra.mxu0 0.0
    %1069 = vmatprep.subr.mxu0 0.0
    %1070 = vmatpush2.msra.mxu0 0.0
    %1071 = vmatprep.subr.mxu0 0.0
    %1072 = vmatpush2.msra.mxu0 0.0
    %1073 = vmatprep.subr.mxu0 0.0
    %1074 = vmatpush2.msra.mxu0 0.0
    %1075 = vmatprep.subr.mxu0 0.0
    %1076 = vmatpush2.msra.mxu0 0.0
    %1077 = vmatprep.subr.mxu0 0.0
    %1078 = vmatpush2.msra.mxu0 0.0
    %1079 = vmatprep.subr.mxu0 0.0
    %1080 = vmatpush2.msra.mxu0 0.0
    %1081 = vmatprep.mubr.f32.mxu0 0.0
    %1082 = vmatmul.mubr.f32.gmra.mxu0 %v1015
    %v1083 = vpop.f32.mrf.mxu0
    %v1084 = vadd.f32 %v1009, %v1083
    %v1085 = vpop.f32.mrf.mxu0
    %1086 = vdwg.mxu0
    %1087 = vst [vmem:[#allocation5] sm:$0xff] %v1084
    // Predicated region
    $region30: #{tpu_custom_call.1} parent=1 // pred_check
      _
    $region31: #{tpu_custom_call.1} parent=1 // pred_check_branch
      %1089 = sbr.rel (0) target = $region33
    $region32: #{tpu_custom_call.1} parent=1 // pred_region
      %s1091 = ssub.s32 128, 128
      %1092 = vsyncadd [#allocation4], %s1091
      %s1094 = sshll.u32 [#allocation5], 4
      %s1095 = int_to_ptr.vmem [resolvable:$true] %s1094
      %1097 = dma.vmem_to_hbm [thread:$0]  %s1095, 128, %s6, [#allocation4]
    $region33: #{tpu_custom_call.1} parent=1 // pred_fallthru
      _
    // Predicated region
    $region34: #{tpu_custom_call.1} parent=1 // pred_check
      _
    $region35: #{tpu_custom_call.1} parent=1 // pred_check_branch
      %1099 = sbr.rel (0) target = $region37
    $region36: #{tpu_custom_call.1} parent=1 // pred_region
      %1100 = dma.done [#allocation4], 128
    $region37: #{tpu_custom_call.1} parent=1 // pred_fallthru
      _
    %1101 = vsyncpa [#allocation3], 1
    %1102 = vsyncpa [#allocation4], 1

</llo_original>
